<compile_context>
chip_gen: v7x
topology: tpu7x:2x2x1
jax: 0.10.0
libtpu: 0.0.40
codegen_flags: <defaults>
</compile_context>

<pallas_src>
import functools

import jax
import jax.numpy as jnp
from jax.experimental import pallas as pl
from jax.experimental.pallas import tpu as pltpu


# --------------------------------------------------------------------------- kernel
def _mmg_kernel(x_ref, dmix_ref, dinvc_ref, dinvs_ref, wre_ref, wim_ref,
                ablk_ref, wblk_ref, bias_ref, o_ref):
    # x_ref block: (1, M*n, cols) -- lane-dense slab, col = b_local*d + dd.
    n = dinvc_ref.shape[0]
    xs = x_ref[0]                                                        # (M*n, cols)

    # Mean over M and forward DFT fused into one MXU call:
    #   rows [0,n) = f_mean, [n,2n) = Re FFT(f_mean), [2n,3n) = Im FFT(f_mean).
    R = jnp.dot(dmix_ref[...], xs, preferred_element_type=jnp.float32)   # (3n, cols)
    fm = R[:n]
    x_re = R[n:2 * n]
    x_im = R[2 * n:]

    # Complex elementwise gate (W tiled across the Bb batch column-groups).
    w_re = wre_ref[...]
    w_im = wim_ref[...]
    xt_re = w_re * x_re - w_im * x_im
    xt_im = w_re * x_im + w_im * x_re

    # Inverse-DFT real part, split into C / -S halves (1/n folded) -> no sublane concat.
    f_tilde = (jnp.dot(dinvc_ref[...], xt_re, preferred_element_type=jnp.float32) +
               jnp.dot(dinvs_ref[...], xt_im, preferred_element_type=jnp.float32))

    # Residual; dropout is identity in eval mode.
    # TODO(synk): training-mode dropout (pltpu.prng_*) not implemented; eval semantics only.
    y = fm + f_tilde

    # LayerNorm over d via block-diagonal averaging matmuls (stays lane-dense;
    # gamma/beta are folded into wblk / bias in the wrapper).
    A = ablk_ref[...]
    mu = jnp.dot(y, A, preferred_element_type=jnp.float32)        # group mean, broadcast
    yc = y - mu
    var = jnp.dot(yc * yc, A, preferred_element_type=jnp.float32)  # biased variance
    y_norm = yc * jax.lax.rsqrt(var + 1e-5)

    # Linear: block-diag(diag(gamma) @ W^T); bias = beta @ W^T + b, tiled over batches.
    out = jnp.dot(y_norm, wblk_ref[...], preferred_element_type=jnp.float32) + bias_ref[...]
    o_ref[0] = out.astype(o_ref.dtype)


# --------------------------------------------------------------------- tiling choices
def _prefer_multi_step():
    """>=2 grid steps only helps where 'parallel' grid axes shard across 2 TensorCores
    (v4 / v5p / v7x).  Single-TC parts (v5e / v6e) just pay ~0.35us per extra step."""
    try:
        kind = jax.devices()[0].device_kind.lower()
    except Exception:
        return True
    single_tc = ("lite" in kind) or ("v5e" in kind) or ("v6" in kind)
    return not single_tc


def _pick_block_batch(B, d, *, max_cols=256, prefer_multi_step=True):
    """Batch elements per grid step (Bb).

    * Caps the slab width Bb*d: the two (cols, cols) kron constants scale as cols^2
      in both VMEM and MXU work (v7x only has 64 MiB VMEM), so keep them small.
    * Keeps the slab lane-dense (>=128 lanes) whenever possible (unmasked vst,
      full VPU lane utilization).
    * prefer_multi_step keeps >=2 grid steps so both TensorCores get work.
    * If B has no suitable divisor, the wrapper zero-pads B instead of falling back
      to lane-sparse tiles.
    """
    def cdiv(a, b):
        return -(-a // b)

    bb_cap = max(1, max_cols // d)

    def lane_dense(bb):
        return bb * d >= 128 or bb >= B

    divisors = [bb for bb in range(min(B, bb_cap), 0, -1) if B % bb == 0]
    if prefer_multi_step:
        for bb in divisors:
            if B // bb >= 2 and lane_dense(bb):
                return bb
    for bb in divisors:
        if lane_dense(bb):
            return bb
    # No suitable divisor (e.g. prime B): pick a capped width; the wrapper pads B.
    if prefer_multi_step:
        for bb in range(bb_cap, 0, -1):
            if lane_dense(bb) and cdiv(B, bb) >= 2:
                return bb
    return bb_cap


def _const_spec(shape, single_buffer):
    index_map = lambda g, _r=len(shape): (0,) * _r
    if single_buffer:
        # Grid-invariant constants: one VMEM buffer is enough (no pipelining needed).
        return pl.BlockSpec(shape, index_map, pipeline_mode=pl.Buffered(1))
    return pl.BlockSpec(shape, index_map)


# ------------------------------------------------------------------- jitted forward
@functools.partial(jax.jit, static_argnames=("Bb", "single_buffer"))
def _mmg_forward_jit(x, dmix, dinv_c, dinv_s, wre_t, wim_t, ablk, wblk, bias_t,
                     *, Bb, single_buffer):
    B, M, n, d = x.shape
    Bp = -(-B // Bb) * Bb
    if Bp != B:                       # pad rather than degrade to lane-sparse tiles
        x = jnp.pad(x, ((0, Bp - B), (0, 0), (0, 0), (0, 0)))
    G = Bp // Bb
    cols = Bb * d

    # Lane-dense pre-layout (cheap XLA transpose): row = m*n + r, col = b_local*d + dd.
    x_slab = (x.reshape(G, Bb, M, n, d)
               .transpose(0, 2, 3, 1, 4)
               .reshape(G, M * n, cols))

    const_shapes = ((3 * n, M * n), (n, n), (n, n), (n, cols), (n, cols),
                    (cols, cols), (cols, cols), (1, cols))
    in_specs = [pl.BlockSpec((1, M * n, cols), lambda g: (g, 0, 0))]
    in_specs += [_const_spec(s, single_buffer) for s in const_shapes]

    flops = G * (2 * (3 * n) * (M * n) * cols        # fused mean + forward DFT
                 + 2 * (2 * n * n * cols)            # inverse DFT (C and S halves)
                 + 3 * (2 * n * cols * cols))        # LN mean / LN var / Linear
    bytes_accessed = 4 * (G * M * n * cols + G * n * cols
                          + sum(a * b for a, b in const_shapes))

    out_slab = pl.pallas_call(
        _mmg_kernel,
        out_shape=jax.ShapeDtypeStruct((G, n, cols), jnp.float32),
        grid=(G,),
        in_specs=in_specs,
        out_specs=pl.BlockSpec((1, n, cols), lambda g: (g, 0, 0)),
        compiler_params=pltpu.CompilerParams(dimension_semantics=("parallel",)),
        cost_estimate=pl.CostEstimate(flops=int(flops),
                                      transcendentals=int(G * n * cols),
                                      bytes_accessed=int(bytes_accessed)),
    )(x_slab, dmix, dinv_c, dinv_s, wre_t, wim_t, ablk, wblk, bias_t)

    # Cheap wrapper-side layout fixup: lane-dense (G, n, Bb*d) -> (B, n, d).
    out = out_slab.reshape(G, n, Bb, d).transpose(0, 2, 1, 3).reshape(Bp, n, d)
    return out[:B]


# ----------------------------------------------------------- hoisted constant prep
def make_mmg_constants(w_re, w_im, gamma, beta, lin_w, lin_b, *, M, n, d, Bb):
    """Build every trace-time constant ONCE (hoisted out of the per-call path)."""
    f32 = jnp.float32
    j = jnp.arange(n, dtype=f32)
    ang = 2.0 * jnp.pi * (j[:, None] * j[None, :]) / n
    C, S = jnp.cos(ang), jnp.sin(ang)

    # Fused (mean over M) + forward DFT: [I_n; C; -S] tiled M times, 1/M folded.
    dmix = jnp.tile(jnp.concatenate([jnp.eye(n, dtype=f32), C, -S], axis=0),
                    (1, M)) * (1.0 / M)                                 # (3n, M*n)
    dinv_c = C * (1.0 / n)                                              # (n, n)
    dinv_s = -S * (1.0 / n)                                             # (n, n)

    # Complex gate tiled across the Bb batch column-groups.
    wre_t = jnp.tile(w_re.astype(f32), (1, Bb))                         # (n, Bb*d)
    wim_t = jnp.tile(w_im.astype(f32), (1, Bb))

    # Block-diagonal LayerNorm averaging matrix and gamma-folded Linear matrix.
    eye_b = jnp.eye(Bb, dtype=f32)
    ablk = jnp.kron(eye_b, jnp.full((d, d), 1.0 / d, dtype=f32))        # (cols, cols)
    w_eff = (gamma[:, None] * lin_w.T).astype(f32)                      # diag(gamma) @ W^T
    wblk = jnp.kron(eye_b, w_eff)                                       # (cols, cols)
    bias_t = jnp.tile(beta @ lin_w.T + lin_b, Bb).reshape(1, Bb * d)    # (1, cols)

    return dmix, dinv_c, dinv_s, wre_t, wim_t, ablk, wblk, bias_t


class MMGKernel:
    """Eval-mode MMG forward.  Constants are prepared once per parameter set, so the
    per-call work is just: x layout transform -> pallas_call -> output un-layout."""

    def __init__(self, w_re, w_im, gamma, beta, lin_w, lin_b, *, M, n, d, batch,
                 max_cols=256):
        self.Bb = _pick_block_batch(batch, d, max_cols=max_cols,
                                    prefer_multi_step=_prefer_multi_step())
        self.consts = make_mmg_constants(w_re, w_im, gamma, beta, lin_w, lin_b,
                                         M=M, n=n, d=d, Bb=self.Bb)

    def __call__(self, x, *, single_buffer_consts=True):
        return _mmg_forward_jit(x, *self.consts, Bb=self.Bb,
                                single_buffer=single_buffer_consts)


# -------------------------------------------------------------------------- reference
def mmg_reference(x, w_re, w_im, gamma, beta, lin_w, lin_b):
    """Pure-JAX reference mirroring the PyTorch forward (eval mode)."""
    f_mean = jnp.mean(x, axis=1)                        # (B, n, d)
    X = jnp.fft.fft(f_mean, axis=1)
    W = w_re + 1j * w_im
    X_tilde = W[None] * X
    f_tilde = jnp.fft.ifft(X_tilde, axis=1).real.astype(jnp.float32)
    y = f_mean + f_tilde
    mu = jnp.mean(y, axis=-1, keepdims=True)
    var = jnp.mean((y - mu) ** 2, axis=-1, keepdims=True)
    y_ln = (y - mu) / jnp.sqrt(var + 1e-5) * gamma + beta
    return y_ln @ lin_w.T + lin_b


# ------------------------------------------------------------------------------ main
if __name__ == "__main__":
    B, M, n, d = 16, 4, 16, 32    # small, but enough batch to fill 256 lanes per step

    key = jax.random.PRNGKey(0)
    kx, kwr, kwi, kg, kb, klw, klb = jax.random.split(key, 7)

    x = jax.random.normal(kx, (B, M, n, d), dtype=jnp.float32)

    # Deterministic parameter init (synthetic; shapes from MMG.__init__).
    w_re = jax.random.normal(kwr, (n, d), dtype=jnp.float32) * (2.0 ** -0.5)
    w_im = jax.random.normal(kwi, (n, d), dtype=jnp.float32) * (2.0 ** -0.5)
    gamma = 1.0 + 0.1 * jax.random.normal(kg, (d,), dtype=jnp.float32)
    beta = 0.1 * jax.random.normal(kb, (d,), dtype=jnp.float32)
    lin_w = jax.random.normal(klw, (d, d), dtype=jnp.float32) * (1.0 / jnp.sqrt(d))
    lin_b = jax.random.normal(klb, (d,), dtype=jnp.float32) * 0.01

    mmg = MMGKernel(w_re, w_im, gamma, beta, lin_w, lin_b, M=M, n=n, d=d, batch=B)
    ref = mmg_reference(x, w_re, w_im, gamma, beta, lin_w, lin_b)

    def _run(single_buffer):
        out = jax.block_until_ready(mmg(x, single_buffer_consts=single_buffer))
        assert out.shape == (B, n, d)
        max_err = float(jnp.max(jnp.abs(out - ref)))
        assert max_err < 5e-4, f"max_err={max_err}"
        return out

    try:
        out = _run(True)    # single-buffered grid-invariant constants (pl.Buffered(1))
    except Exception:
        out = _run(False)   # conservative fallback: default double buffering

    print("KERNEL_OK")
</pallas_src>

<mosaic_0001>
module attributes {stable_mosaic.version = 11 : i64} {
  func.func @_mmg_kernel(%arg0: i32, %arg1: memref<1x64x256xf32, #tpu.memory_space<vmem>>, %arg2: memref<48x64xf32, #tpu.memory_space<vmem>>, %arg3: memref<16x16xf32, #tpu.memory_space<vmem>>, %arg4: memref<16x16xf32, #tpu.memory_space<vmem>>, %arg5: memref<16x256xf32, #tpu.memory_space<vmem>>, %arg6: memref<16x256xf32, #tpu.memory_space<vmem>>, %arg7: memref<256x256xf32, #tpu.memory_space<vmem>>, %arg8: memref<256x256xf32, #tpu.memory_space<vmem>>, %arg9: memref<1x256xf32, #tpu.memory_space<vmem>>, %arg10: memref<1x16x256xf32, #tpu.memory_space<vmem>>) attributes {dimension_semantics = [#tpu.dimension_semantics<parallel>], iteration_bounds = array<i64: 2>, scalar_prefetch = 0 : i64, scratch_operands = 0 : i64, tpu.core_type = #tpu.core_type<tc>, window_params = [{transform_indices = @transform_0, window_bounds = array<i64: 1, 64, 256>}, {pipeline_mode = #tpu.pipeline_mode<synchronous>, transform_indices = @transform_1, window_bounds = array<i64: 48, 64>}, {pipeline_mode = #tpu.pipeline_mode<synchronous>, transform_indices = @transform_2, window_bounds = array<i64: 16, 16>}, {pipeline_mode = #tpu.pipeline_mode<synchronous>, transform_indices = @transform_3, window_bounds = array<i64: 16, 16>}, {pipeline_mode = #tpu.pipeline_mode<synchronous>, transform_indices = @transform_4, window_bounds = array<i64: 16, 256>}, {pipeline_mode = #tpu.pipeline_mode<synchronous>, transform_indices = @transform_5, window_bounds = array<i64: 16, 256>}, {pipeline_mode = #tpu.pipeline_mode<synchronous>, transform_indices = @transform_6, window_bounds = array<i64: 256, 256>}, {pipeline_mode = #tpu.pipeline_mode<synchronous>, transform_indices = @transform_7, window_bounds = array<i64: 256, 256>}, {pipeline_mode = #tpu.pipeline_mode<synchronous>, transform_indices = @transform_8, window_bounds = array<i64: 1, 256>}, {transform_indices = @transform_9, window_bounds = array<i64: 1, 16, 256>}]} {
    %c0 = arith.constant 0 : index
    %c0_0 = arith.constant 0 : index
    %c0_1 = arith.constant 0 : index
    %0 = vector.load %arg1[%c0, %c0_0, %c0_1] : memref<1x64x256xf32, #tpu.memory_space<vmem>>, vector<1x64x256xf32>
    %1 = vector.shape_cast %0 : vector<1x64x256xf32> to vector<64x256xf32>
    %c0_2 = arith.constant 0 : index
    %c0_3 = arith.constant 0 : index
    %2 = vector.load %arg2[%c0_2, %c0_3] : memref<48x64xf32, #tpu.memory_space<vmem>>, vector<48x64xf32>
    %cst = arith.constant dense<0.000000e+00> : vector<48x256xf32>
    %3 = tpu.matmul %2, %1, %cst {dimension_numbers = #tpu.dot_dimension_numbers<[1], [0], [0], [1], [0, 0, 1, 1], [], []>} : vector<48x64xf32>, vector<64x256xf32>, vector<48x256xf32> -> vector<48x256xf32>
    %4 = vector.extract_strided_slice %3 {offsets = [0, 0], sizes = [16, 256], strides = [1, 1]} : vector<48x256xf32> to vector<16x256xf32>
    %5 = vector.extract_strided_slice %3 {offsets = [16, 0], sizes = [16, 256], strides = [1, 1]} : vector<48x256xf32> to vector<16x256xf32>
    %6 = vector.extract_strided_slice %3 {offsets = [32, 0], sizes = [16, 256], strides = [1, 1]} : vector<48x256xf32> to vector<16x256xf32>
    %c0_4 = arith.constant 0 : index
    %c0_5 = arith.constant 0 : index
    %7 = vector.load %arg5[%c0_4, %c0_5] : memref<16x256xf32, #tpu.memory_space<vmem>>, vector<16x256xf32>
    %c0_6 = arith.constant 0 : index
    %c0_7 = arith.constant 0 : index
    %8 = vector.load %arg6[%c0_6, %c0_7] : memref<16x256xf32, #tpu.memory_space<vmem>>, vector<16x256xf32>
    %9 = arith.mulf %7, %5 : vector<16x256xf32>
    %10 = arith.mulf %8, %6 : vector<16x256xf32>
    %11 = arith.subf %9, %10 : vector<16x256xf32>
    %12 = arith.mulf %7, %6 : vector<16x256xf32>
    %13 = arith.mulf %8, %5 : vector<16x256xf32>
    %14 = arith.addf %12, %13 : vector<16x256xf32>
    %c0_8 = arith.constant 0 : index
    %c0_9 = arith.constant 0 : index
    %15 = vector.load %arg3[%c0_8, %c0_9] : memref<16x16xf32, #tpu.memory_space<vmem>>, vector<16x16xf32>
    %cst_10 = arith.constant dense<0.000000e+00> : vector<16x256xf32>
    %16 = tpu.matmul %15, %11, %cst_10 {dimension_numbers = #tpu.dot_dimension_numbers<[1], [0], [0], [1], [0, 0, 1, 1], [], []>} : vector<16x16xf32>, vector<16x256xf32>, vector<16x256xf32> -> vector<16x256xf32>
    %c0_11 = arith.constant 0 : index
    %c0_12 = arith.constant 0 : index
    %17 = vector.load %arg4[%c0_11, %c0_12] : memref<16x16xf32, #tpu.memory_space<vmem>>, vector<16x16xf32>
    %cst_13 = arith.constant dense<0.000000e+00> : vector<16x256xf32>
    %18 = tpu.matmul %17, %14, %cst_13 {dimension_numbers = #tpu.dot_dimension_numbers<[1], [0], [0], [1], [0, 0, 1, 1], [], []>} : vector<16x16xf32>, vector<16x256xf32>, vector<16x256xf32> -> vector<16x256xf32>
    %19 = arith.addf %16, %18 : vector<16x256xf32>
    %20 = arith.addf %4, %19 : vector<16x256xf32>
    %c0_14 = arith.constant 0 : index
    %c0_15 = arith.constant 0 : index
    %21 = vector.load %arg7[%c0_14, %c0_15] : memref<256x256xf32, #tpu.memory_space<vmem>>, vector<256x256xf32>
    %cst_16 = arith.constant dense<0.000000e+00> : vector<16x256xf32>
    %22 = tpu.matmul %20, %21, %cst_16 {dimension_numbers = #tpu.dot_dimension_numbers<[1], [0], [0], [1], [0, 0, 1, 1], [], []>} : vector<16x256xf32>, vector<256x256xf32>, vector<16x256xf32> -> vector<16x256xf32>
    %23 = arith.subf %20, %22 : vector<16x256xf32>
    %24 = arith.mulf %23, %23 : vector<16x256xf32>
    %cst_17 = arith.constant dense<0.000000e+00> : vector<16x256xf32>
    %25 = tpu.matmul %24, %21, %cst_17 {dimension_numbers = #tpu.dot_dimension_numbers<[1], [0], [0], [1], [0, 0, 1, 1], [], []>} : vector<16x256xf32>, vector<256x256xf32>, vector<16x256xf32> -> vector<16x256xf32>
    %cst_18 = arith.constant 9.99999974E-6 : f32
    %26 = vector.broadcast %cst_18 : f32 to vector<16x256xf32>
    %27 = arith.addf %25, %26 : vector<16x256xf32>
    %28 = math.rsqrt %27 : vector<16x256xf32>
    %29 = arith.mulf %23, %28 : vector<16x256xf32>
    %c0_19 = arith.constant 0 : index
    %c0_20 = arith.constant 0 : index
    %30 = vector.load %arg8[%c0_19, %c0_20] : memref<256x256xf32, #tpu.memory_space<vmem>>, vector<256x256xf32>
    %cst_21 = arith.constant dense<0.000000e+00> : vector<16x256xf32>
    %31 = tpu.matmul %29, %30, %cst_21 {dimension_numbers = #tpu.dot_dimension_numbers<[1], [0], [0], [1], [0, 0, 1, 1], [], []>} : vector<16x256xf32>, vector<256x256xf32>, vector<16x256xf32> -> vector<16x256xf32>
    %c0_22 = arith.constant 0 : index
    %c0_23 = arith.constant 0 : index
    %32 = vector.load %arg9[%c0_22, %c0_23] : memref<1x256xf32, #tpu.memory_space<vmem>>, vector<1x256xf32>
    %33 = vector.broadcast %32 : vector<1x256xf32> to vector<16x256xf32>
    %34 = arith.addf %31, %33 : vector<16x256xf32>
    %c0_24 = arith.constant 0 : index
    %c0_25 = arith.constant 0 : index
    %c0_26 = arith.constant 0 : index
    %35 = vector.load %arg10[%c0_24, %c0_25, %c0_26] : memref<1x16x256xf32, #tpu.memory_space<vmem>>, vector<1x16x256xf32>
    %36 = vector.shape_cast %35 : vector<1x16x256xf32> to vector<16x256xf32>
    %37 = vector.shape_cast %34 : vector<16x256xf32> to vector<1x16x256xf32>
    tpu.vector_store %arg10[%c0_24, %c0_25, %c0_26], %37 {strides = array<i32>} : memref<1x16x256xf32, #tpu.memory_space<vmem>>, vector<1x16x256xf32>,
    return
  }
  func.func @transform_0(%arg0: i32) -> (i32, i32, i32) {
    %c0_i32 = arith.constant 0 : i32
    %c0_i32_0 = arith.constant 0 : i32
    %c0_i32_1 = arith.constant 0 : i32
    return %arg0, %c0_i32, %c0_i32_0 : i32, i32, i32
  }
  func.func @transform_1(%arg0: i32) -> (i32, i32) {
    %c0_i32 = arith.constant 0 : i32
    %c0_i32_0 = arith.constant 0 : i32
    %c0_i32_1 = arith.constant 0 : i32
    return %c0_i32, %c0_i32_0 : i32, i32
  }
  func.func @transform_2(%arg0: i32) -> (i32, i32) {
    %c0_i32 = arith.constant 0 : i32
    %c0_i32_0 = arith.constant 0 : i32
    %c0_i32_1 = arith.constant 0 : i32
    return %c0_i32, %c0_i32_0 : i32, i32
  }
  func.func @transform_3(%arg0: i32) -> (i32, i32) {
    %c0_i32 = arith.constant 0 : i32
    %c0_i32_0 = arith.constant 0 : i32
    %c0_i32_1 = arith.constant 0 : i32
    return %c0_i32, %c0_i32_0 : i32, i32
  }
  func.func @transform_4(%arg0: i32) -> (i32, i32) {
    %c0_i32 = arith.constant 0 : i32
    %c0_i32_0 = arith.constant 0 : i32
    %c0_i32_1 = arith.constant 0 : i32
    return %c0_i32, %c0_i32_0 : i32, i32
  }
  func.func @transform_5(%arg0: i32) -> (i32, i32) {
    %c0_i32 = arith.constant 0 : i32
    %c0_i32_0 = arith.constant 0 : i32
    %c0_i32_1 = arith.constant 0 : i32
    return %c0_i32, %c0_i32_0 : i32, i32
  }
  func.func @transform_6(%arg0: i32) -> (i32, i32) {
    %c0_i32 = arith.constant 0 : i32
    %c0_i32_0 = arith.constant 0 : i32
    %c0_i32_1 = arith.constant 0 : i32
    return %c0_i32, %c0_i32_0 : i32, i32
  }
  func.func @transform_7(%arg0: i32) -> (i32, i32) {
    %c0_i32 = arith.constant 0 : i32
    %c0_i32_0 = arith.constant 0 : i32
    %c0_i32_1 = arith.constant 0 : i32
    return %c0_i32, %c0_i32_0 : i32, i32
  }
  func.func @transform_8(%arg0: i32) -> (i32, i32) {
    %c0_i32 = arith.constant 0 : i32
    %c0_i32_0 = arith.constant 0 : i32
    %c0_i32_1 = arith.constant 0 : i32
    return %c0_i32, %c0_i32_0 : i32, i32
  }
  func.func @transform_9(%arg0: i32) -> (i32, i32, i32) {
    %c0_i32 = arith.constant 0 : i32
    %c0_i32_0 = arith.constant 0 : i32
    %c0_i32_1 = arith.constant 0 : i32
    return %arg0, %c0_i32, %c0_i32_0 : i32, i32, i32
  }
}

module attributes {stable_mosaic.version = 11 : i64} {
  func.func @_mmg_kernel(%arg0: i32, %arg1: memref<1x64x256xf32, #tpu.memory_space<vmem>>, %arg2: memref<48x64xf32, #tpu.memory_space<vmem>>, %arg3: memref<16x16xf32, #tpu.memory_space<vmem>>, %arg4: memref<16x16xf32, #tpu.memory_space<vmem>>, %arg5: memref<16x256xf32, #tpu.memory_space<vmem>>, %arg6: memref<16x256xf32, #tpu.memory_space<vmem>>, %arg7: memref<256x256xf32, #tpu.memory_space<vmem>>, %arg8: memref<256x256xf32, #tpu.memory_space<vmem>>, %arg9: memref<1x256xf32, #tpu.memory_space<vmem>>, %arg10: memref<1x16x256xf32, #tpu.memory_space<vmem>>) attributes {dimension_semantics = [#tpu.dimension_semantics<parallel>], iteration_bounds = array<i64: 2>, scalar_prefetch = 0 : i64, scratch_operands = 0 : i64, tpu.core_type = #tpu.core_type<tc>, window_params = [{transform_indices = @transform_0, window_bounds = array<i64: 1, 64, 256>}, {pipeline_mode = #tpu.pipeline_mode<synchronous>, transform_indices = @transform_1, window_bounds = array<i64: 48, 64>}, {pipeline_mode = #tpu.pipeline_mode<synchronous>, transform_indices = @transform_2, window_bounds = array<i64: 16, 16>}, {pipeline_mode = #tpu.pipeline_mode<synchronous>, transform_indices = @transform_3, window_bounds = array<i64: 16, 16>}, {pipeline_mode = #tpu.pipeline_mode<synchronous>, transform_indices = @transform_4, window_bounds = array<i64: 16, 256>}, {pipeline_mode = #tpu.pipeline_mode<synchronous>, transform_indices = @transform_5, window_bounds = array<i64: 16, 256>}, {pipeline_mode = #tpu.pipeline_mode<synchronous>, transform_indices = @transform_6, window_bounds = array<i64: 256, 256>}, {pipeline_mode = #tpu.pipeline_mode<synchronous>, transform_indices = @transform_7, window_bounds = array<i64: 256, 256>}, {pipeline_mode = #tpu.pipeline_mode<synchronous>, transform_indices = @transform_8, window_bounds = array<i64: 1, 256>}, {transform_indices = @transform_9, window_bounds = array<i64: 1, 16, 256>}]} {
    %c0 = arith.constant 0 : index
    %c0_0 = arith.constant 0 : index
    %c0_1 = arith.constant 0 : index
    %0 = vector.load %arg1[%c0, %c0_0, %c0_1] : memref<1x64x256xf32, #tpu.memory_space<vmem>>, vector<1x64x256xf32>
    %1 = vector.shape_cast %0 : vector<1x64x256xf32> to vector<64x256xf32>
    %c0_2 = arith.constant 0 : index
    %c0_3 = arith.constant 0 : index
    %2 = vector.load %arg2[%c0_2, %c0_3] : memref<48x64xf32, #tpu.memory_space<vmem>>, vector<48x64xf32>
    %cst = arith.constant dense<0.000000e+00> : vector<48x256xf32>
    %3 = tpu.matmul %2, %1, %cst {dimension_numbers = #tpu.dot_dimension_numbers<[1], [0], [0], [1], [0, 0, 1, 1], [], []>} : vector<48x64xf32>, vector<64x256xf32>, vector<48x256xf32> -> vector<48x256xf32>
    %4 = vector.extract_strided_slice %3 {offsets = [0, 0], sizes = [16, 256], strides = [1, 1]} : vector<48x256xf32> to vector<16x256xf32>
    %5 = vector.extract_strided_slice %3 {offsets = [16, 0], sizes = [16, 256], strides = [1, 1]} : vector<48x256xf32> to vector<16x256xf32>
    %6 = vector.extract_strided_slice %3 {offsets = [32, 0], sizes = [16, 256], strides = [1, 1]} : vector<48x256xf32> to vector<16x256xf32>
    %c0_4 = arith.constant 0 : index
    %c0_5 = arith.constant 0 : index
    %7 = vector.load %arg5[%c0_4, %c0_5] : memref<16x256xf32, #tpu.memory_space<vmem>>, vector<16x256xf32>
    %c0_6 = arith.constant 0 : index
    %c0_7 = arith.constant 0 : index
    %8 = vector.load %arg6[%c0_6, %c0_7] : memref<16x256xf32, #tpu.memory_space<vmem>>, vector<16x256xf32>
    %9 = arith.mulf %7, %5 : vector<16x256xf32>
    %10 = arith.mulf %8, %6 : vector<16x256xf32>
    %11 = arith.subf %9, %10 : vector<16x256xf32>
    %12 = arith.mulf %7, %6 : vector<16x256xf32>
    %13 = arith.mulf %8, %5 : vector<16x256xf32>
    %14 = arith.addf %12, %13 : vector<16x256xf32>
    %c0_8 = arith.constant 0 : index
    %c0_9 = arith.constant 0 : index
    %15 = vector.load %arg3[%c0_8, %c0_9] : memref<16x16xf32, #tpu.memory_space<vmem>>, vector<16x16xf32>
    %cst_10 = arith.constant dense<0.000000e+00> : vector<16x256xf32>
    %16 = tpu.matmul %15, %11, %cst_10 {dimension_numbers = #tpu.dot_dimension_numbers<[1], [0], [0], [1], [0, 0, 1, 1], [], []>} : vector<16x16xf32>, vector<16x256xf32>, vector<16x256xf32> -> vector<16x256xf32>
    %c0_11 = arith.constant 0 : index
    %c0_12 = arith.constant 0 : index
    %17 = vector.load %arg4[%c0_11, %c0_12] : memref<16x16xf32, #tpu.memory_space<vmem>>, vector<16x16xf32>
    %cst_13 = arith.constant dense<0.000000e+00> : vector<16x256xf32>
    %18 = tpu.matmul %17, %14, %cst_13 {dimension_numbers = #tpu.dot_dimension_numbers<[1], [0], [0], [1], [0, 0, 1, 1], [], []>} : vector<16x16xf32>, vector<16x256xf32>, vector<16x256xf32> -> vector<16x256xf32>
    %19 = arith.addf %16, %18 : vector<16x256xf32>
    %20 = arith.addf %4, %19 : vector<16x256xf32>
    %c0_14 = arith.constant 0 : index
    %c0_15 = arith.constant 0 : index
    %21 = vector.load %arg7[%c0_14, %c0_15] : memref<256x256xf32, #tpu.memory_space<vmem>>, vector<256x256xf32>
    %cst_16 = arith.constant dense<0.000000e+00> : vector<16x256xf32>
    %22 = tpu.matmul %20, %21, %cst_16 {dimension_numbers = #tpu.dot_dimension_numbers<[1], [0], [0], [1], [0, 0, 1, 1], [], []>} : vector<16x256xf32>, vector<256x256xf32>, vector<16x256xf32> -> vector<16x256xf32>
    %23 = arith.subf %20, %22 : vector<16x256xf32>
    %24 = arith.mulf %23, %23 : vector<16x256xf32>
    %cst_17 = arith.constant dense<0.000000e+00> : vector<16x256xf32>
    %25 = tpu.matmul %24, %21, %cst_17 {dimension_numbers = #tpu.dot_dimension_numbers<[1], [0], [0], [1], [0, 0, 1, 1], [], []>} : vector<16x256xf32>, vector<256x256xf32>, vector<16x256xf32> -> vector<16x256xf32>
    %cst_18 = arith.constant 9.99999974E-6 : f32
    %26 = vector.broadcast %cst_18 : f32 to vector<16x256xf32>
    %27 = arith.addf %25, %26 : vector<16x256xf32>
    %28 = math.rsqrt %27 : vector<16x256xf32>
    %29 = arith.mulf %23, %28 : vector<16x256xf32>
    %c0_19 = arith.constant 0 : index
    %c0_20 = arith.constant 0 : index
    %30 = vector.load %arg8[%c0_19, %c0_20] : memref<256x256xf32, #tpu.memory_space<vmem>>, vector<256x256xf32>
    %cst_21 = arith.constant dense<0.000000e+00> : vector<16x256xf32>
    %31 = tpu.matmul %29, %30, %cst_21 {dimension_numbers = #tpu.dot_dimension_numbers<[1], [0], [0], [1], [0, 0, 1, 1], [], []>} : vector<16x256xf32>, vector<256x256xf32>, vector<16x256xf32> -> vector<16x256xf32>
    %c0_22 = arith.constant 0 : index
    %c0_23 = arith.constant 0 : index
    %32 = vector.load %arg9[%c0_22, %c0_23] : memref<1x256xf32, #tpu.memory_space<vmem>>, vector<1x256xf32>
    %33 = vector.broadcast %32 : vector<1x256xf32> to vector<16x256xf32>
    %34 = arith.addf %31, %33 : vector<16x256xf32>
    %c0_24 = arith.constant 0 : index
    %c0_25 = arith.constant 0 : index
    %c0_26 = arith.constant 0 : index
    %35 = vector.load %arg10[%c0_24, %c0_25, %c0_26] : memref<1x16x256xf32, #tpu.memory_space<vmem>>, vector<1x16x256xf32>
    %36 = vector.shape_cast %35 : vector<1x16x256xf32> to vector<16x256xf32>
    %37 = vector.shape_cast %34 : vector<16x256xf32> to vector<1x16x256xf32>
    tpu.vector_store %arg10[%c0_24, %c0_25, %c0_26], %37 {strides = array<i32>} : memref<1x16x256xf32, #tpu.memory_space<vmem>>, vector<1x16x256xf32>,
    return
  }
  func.func @transform_0(%arg0: i32) -> (i32, i32, i32) {
    %c0_i32 = arith.constant 0 : i32
    %c0_i32_0 = arith.constant 0 : i32
    %c0_i32_1 = arith.constant 0 : i32
    return %arg0, %c0_i32, %c0_i32_0 : i32, i32, i32
  }
  func.func @transform_1(%arg0: i32) -> (i32, i32) {
    %c0_i32 = arith.constant 0 : i32
    %c0_i32_0 = arith.constant 0 : i32
    %c0_i32_1 = arith.constant 0 : i32
    return %c0_i32, %c0_i32_0 : i32, i32
  }
  func.func @transform_2(%arg0: i32) -> (i32, i32) {
    %c0_i32 = arith.constant 0 : i32
    %c0_i32_0 = arith.constant 0 : i32
    %c0_i32_1 = arith.constant 0 : i32
    return %c0_i32, %c0_i32_0 : i32, i32
  }
  func.func @transform_3(%arg0: i32) -> (i32, i32) {
    %c0_i32 = arith.constant 0 : i32
    %c0_i32_0 = arith.constant 0 : i32
    %c0_i32_1 = arith.constant 0 : i32
    return %c0_i32, %c0_i32_0 : i32, i32
  }
  func.func @transform_4(%arg0: i32) -> (i32, i32) {
    %c0_i32 = arith.constant 0 : i32
    %c0_i32_0 = arith.constant 0 : i32
    %c0_i32_1 = arith.constant 0 : i32
    return %c0_i32, %c0_i32_0 : i32, i32
  }
  func.func @transform_5(%arg0: i32) -> (i32, i32) {
    %c0_i32 = arith.constant 0 : i32
    %c0_i32_0 = arith.constant 0 : i32
    %c0_i32_1 = arith.constant 0 : i32
    return %c0_i32, %c0_i32_0 : i32, i32
  }
  func.func @transform_6(%arg0: i32) -> (i32, i32) {
    %c0_i32 = arith.constant 0 : i32
    %c0_i32_0 = arith.constant 0 : i32
    %c0_i32_1 = arith.constant 0 : i32
    return %c0_i32, %c0_i32_0 : i32, i32
  }
  func.func @transform_7(%arg0: i32) -> (i32, i32) {
    %c0_i32 = arith.constant 0 : i32
    %c0_i32_0 = arith.constant 0 : i32
    %c0_i32_1 = arith.constant 0 : i32
    return %c0_i32, %c0_i32_0 : i32, i32
  }
  func.func @transform_8(%arg0: i32) -> (i32, i32) {
    %c0_i32 = arith.constant 0 : i32
    %c0_i32_0 = arith.constant 0 : i32
    %c0_i32_1 = arith.constant 0 : i32
    return %c0_i32, %c0_i32_0 : i32, i32
  }
  func.func @transform_9(%arg0: i32) -> (i32, i32, i32) {
    %c0_i32 = arith.constant 0 : i32
    %c0_i32_0 = arith.constant 0 : i32
    %c0_i32_1 = arith.constant 0 : i32
    return %arg0, %c0_i32, %c0_i32_0 : i32, i32, i32
  }
}

</mosaic_0001>

<llo_original>
// kernel: _mmg_forward_jit.1
$region0: #{_mmg_forward_jit.1}
  #allocation0 [shape = 'u32[]', space=smem, size = 0x4, offset = 0x4, fixed_abs, tag = 'smem constant byte address 0x4 - core index']
  #allocation1 [shape = 'u32[144,128]{1,0:T(1,128)}', space=vmem, size = 0x12000, scoped, tag = 'internal scratch']
  %s0 = inlined_call_operand.vmem [shape: f32[2,64,256], index: 0, kind: input, shape index: {}]
  %s1 = inlined_call_operand.vmem [shape: f32[48,64], index: 1, kind: input, shape index: {}]
  %s2 = inlined_call_operand.vmem [shape: f32[16,16], index: 2, kind: input, shape index: {}]
  %s3 = inlined_call_operand.vmem [shape: f32[16,16], index: 3, kind: input, shape index: {}]
  %s4 = inlined_call_operand.vmem [shape: f32[16,256], index: 4, kind: input, shape index: {}]
  %s5 = inlined_call_operand.vmem [shape: f32[16,256], index: 5, kind: input, shape index: {}]
  %s6 = inlined_call_operand.vmem [shape: f32[256,256], index: 6, kind: input, shape index: {}]
  %s7 = inlined_call_operand.vmem [shape: f32[256,256], index: 7, kind: input, shape index: {}]
  %s8 = inlined_call_operand.vmem [shape: f32[1,256], index: 8, kind: input, shape index: {}]
  %s9 = inlined_call_operand.vmem [shape: f32[2,16,256], index: 9, kind: output, shape index: {}]
  %s10 = sld [smem:[#allocation0]]
  $region69: #{_mmg_forward_jit.1} parent=0
    _
  %s12 = ssub.s32 1, %s10
  %s13 = scalar_select 0, %s12, %s10
  loop: start=0, step=1, limit=4
  $region2: #{_mmg_forward_jit.1} parent=0 // loop_pre_header
    _
  $region3: #{_mmg_forward_jit.1} parent=0 // loop_header
    %s15 = sphi 0, %s19
    %p16 = scmp.ge.s32.totalorder %s15, 4
    %s25 = sphi 0, %s27
    %s28 = sphi 0, %s25
    %s29 = sphi 0, %s28
    %s45 = sphi 0, %s29
    %s49 = sphi 0, %s49
    %s51 = sphi 0, %s49
    %s52 = sphi 0, %s51
    %s66 = sphi 0, %s52
    %s70 = sphi 0, %s70
    %s72 = sphi 0, %s70
    %s73 = sphi 0, %s72
    %s87 = sphi 0, %s73
    %s91 = sphi 0, %s91
    %s93 = sphi 0, %s91
    %s94 = sphi 0, %s93
    %s108 = sphi 0, %s94
    %s112 = sphi 0, %s112
    %s114 = sphi 0, %s112
    %s115 = sphi 0, %s114
    %s129 = sphi 0, %s115
    %s133 = sphi 0, %s133
    %s135 = sphi 0, %s133
    %s136 = sphi 0, %s135
    %s150 = sphi 0, %s136
    %s154 = sphi 0, %s154
    %s156 = sphi 0, %s154
    %s157 = sphi 0, %s156
    %s171 = sphi 0, %s157
    %s175 = sphi 0, %s175
    %s177 = sphi 0, %s175
    %s178 = sphi 0, %s177
    %s192 = sphi 0, %s178
    %s196 = sphi 0, %s196
    %s198 = sphi 0, %s196
    %s199 = sphi 0, %s198
    %s213 = sphi 0, %s199
    %s219 = sphi 0, %s221
    %s222 = sphi 0, %s219
    %s223 = sphi 0, %s222
    %s239 = sphi 0, %s223
  $region4: #{_mmg_forward_jit.1} parent=0 // loop_header_branch
    %18 = sbr.rel (%p16) target = $region8
  $region5: #{_mmg_forward_jit.1} parent=0 // loop_body
    %s20 = ssub.s32 %s15, 1
    %s21 = ssub.s32 %s15, 2
    %s22 = sadd.s32 %s15, 1
    %s23 = ssub.s32 %s15, %s22
    %p24 = scmp.eq.s32.totalorder %s23, 0
    %s26 = sadd.s32 %s25, 1
    %s27 = scalar_select %p24, %s25, %s26
    %p30 = pneg %p24
    %p31 = scmp.eq.s32.totalorder %s15, 1
    %p32 = por %p30, %p31
    %p33 = scmp.ne.s32.totalorder %s25, %s28
    %p34 = scmp.eq.s32.totalorder %s15, 0
    %p35 = por %p33, %p34
    %p36 = scmp.ne.s32.totalorder %s25, %s28
    %p37 = scmp.eq.s32.totalorder %s20, 1
    %p38 = por %p36, %p37
    %p39 = scmp.ne.s32.totalorder %s28, %s29
    %p40 = scmp.eq.s32.totalorder %s20, 0
    %p41 = por %p39, %p40
    %p42 = scmp.ne.s32.totalorder %s28, %s29
    %p43 = scmp.eq.s32.totalorder %s21, 1
    %p44 = por %p42, %p43
    %p46 = scmp.ne.s32.totalorder %s29, %s45
    %p47 = scmp.eq.s32.totalorder %s21, 0
    %p48 = por %p46, %p47
    %s50 = sadd.s32 %s49, 1
    %p53 = scmp.eq.s32.totalorder %s15, 1
    %p54 = scmp.ne.s32.totalorder %s49, %s51
    %p55 = scmp.eq.s32.totalorder %s15, 0
    %p56 = por %p54, %p55
    %p57 = scmp.ne.s32.totalorder %s49, %s51
    %p58 = scmp.eq.s32.totalorder %s20, 1
    %p59 = por %p57, %p58
    %p60 = scmp.ne.s32.totalorder %s51, %s52
    %p61 = scmp.eq.s32.totalorder %s20, 0
    %p62 = por %p60, %p61
    %p63 = scmp.ne.s32.totalorder %s51, %s52
    %p64 = scmp.eq.s32.totalorder %s21, 1
    %p65 = por %p63, %p64
    %p67 = scmp.ne.s32.totalorder %s52, %s66
    %p68 = scmp.eq.s32.totalorder %s21, 0
    %p69 = por %p67, %p68
    %s71 = sadd.s32 %s70, 1
    %p74 = scmp.eq.s32.totalorder %s15, 1
    %p75 = scmp.ne.s32.totalorder %s70, %s72
    %p76 = scmp.eq.s32.totalorder %s15, 0
    %p77 = por %p75, %p76
    %p78 = scmp.ne.s32.totalorder %s70, %s72
    %p79 = scmp.eq.s32.totalorder %s20, 1
    %p80 = por %p78, %p79
    %p81 = scmp.ne.s32.totalorder %s72, %s73
    %p82 = scmp.eq.s32.totalorder %s20, 0
    %p83 = por %p81, %p82
    %p84 = scmp.ne.s32.totalorder %s72, %s73
    %p85 = scmp.eq.s32.totalorder %s21, 1
    %p86 = por %p84, %p85
    %p88 = scmp.ne.s32.totalorder %s73, %s87
    %p89 = scmp.eq.s32.totalorder %s21, 0
    %p90 = por %p88, %p89
    %s92 = sadd.s32 %s91, 1
    %p95 = scmp.eq.s32.totalorder %s15, 1
    %p96 = scmp.ne.s32.totalorder %s91, %s93
    %p97 = scmp.eq.s32.totalorder %s15, 0
    %p98 = por %p96, %p97
    %p99 = scmp.ne.s32.totalorder %s91, %s93
    %p100 = scmp.eq.s32.totalorder %s20, 1
    %p101 = por %p99, %p100
    %p102 = scmp.ne.s32.totalorder %s93, %s94
    %p103 = scmp.eq.s32.totalorder %s20, 0
    %p104 = por %p102, %p103
    %p105 = scmp.ne.s32.totalorder %s93, %s94
    %p106 = scmp.eq.s32.totalorder %s21, 1
    %p107 = por %p105, %p106
    %p109 = scmp.ne.s32.totalorder %s94, %s108
    %p110 = scmp.eq.s32.totalorder %s21, 0
    %p111 = por %p109, %p110
    %s113 = sadd.s32 %s112, 1
    %p116 = scmp.eq.s32.totalorder %s15, 1
    %p117 = scmp.ne.s32.totalorder %s112, %s114
    %p118 = scmp.eq.s32.totalorder %s15, 0
    %p119 = por %p117, %p118
    %p120 = scmp.ne.s32.totalorder %s112, %s114
    %p121 = scmp.eq.s32.totalorder %s20, 1
    %p122 = por %p120, %p121
    %p123 = scmp.ne.s32.totalorder %s114, %s115
    %p124 = scmp.eq.s32.totalorder %s20, 0
    %p125 = por %p123, %p124
    %p126 = scmp.ne.s32.totalorder %s114, %s115
    %p127 = scmp.eq.s32.totalorder %s21, 1
    %p128 = por %p126, %p127
    %p130 = scmp.ne.s32.totalorder %s115, %s129
    %p131 = scmp.eq.s32.totalorder %s21, 0
    %p132 = por %p130, %p131
    %s134 = sadd.s32 %s133, 1
    %p137 = scmp.eq.s32.totalorder %s15, 1
    %p138 = scmp.ne.s32.totalorder %s133, %s135
    %p139 = scmp.eq.s32.totalorder %s15, 0
    %p140 = por %p138, %p139
    %p141 = scmp.ne.s32.totalorder %s133, %s135
    %p142 = scmp.eq.s32.totalorder %s20, 1
    %p143 = por %p141, %p142
    %p144 = scmp.ne.s32.totalorder %s135, %s136
    %p145 = scmp.eq.s32.totalorder %s20, 0
    %p146 = por %p144, %p145
    %p147 = scmp.ne.s32.totalorder %s135, %s136
    %p148 = scmp.eq.s32.totalorder %s21, 1
    %p149 = por %p147, %p148
    %p151 = scmp.ne.s32.totalorder %s136, %s150
    %p152 = scmp.eq.s32.totalorder %s21, 0
    %p153 = por %p151, %p152
    %s155 = sadd.s32 %s154, 1
    %p158 = scmp.eq.s32.totalorder %s15, 1
    %p159 = scmp.ne.s32.totalorder %s154, %s156
    %p160 = scmp.eq.s32.totalorder %s15, 0
    %p161 = por %p159, %p160
    %p162 = scmp.ne.s32.totalorder %s154, %s156
    %p163 = scmp.eq.s32.totalorder %s20, 1
    %p164 = por %p162, %p163
    %p165 = scmp.ne.s32.totalorder %s156, %s157
    %p166 = scmp.eq.s32.totalorder %s20, 0
    %p167 = por %p165, %p166
    %p168 = scmp.ne.s32.totalorder %s156, %s157
    %p169 = scmp.eq.s32.totalorder %s21, 1
    %p170 = por %p168, %p169
    %p172 = scmp.ne.s32.totalorder %s157, %s171
    %p173 = scmp.eq.s32.totalorder %s21, 0
    %p174 = por %p172, %p173
    %s176 = sadd.s32 %s175, 1
    %p179 = scmp.eq.s32.totalorder %s15, 1
    %p180 = scmp.ne.s32.totalorder %s175, %s177
    %p181 = scmp.eq.s32.totalorder %s15, 0
    %p182 = por %p180, %p181
    %p183 = scmp.ne.s32.totalorder %s175, %s177
    %p184 = scmp.eq.s32.totalorder %s20, 1
    %p185 = por %p183, %p184
    %p186 = scmp.ne.s32.totalorder %s177, %s178
    %p187 = scmp.eq.s32.totalorder %s20, 0
    %p188 = por %p186, %p187
    %p189 = scmp.ne.s32.totalorder %s177, %s178
    %p190 = scmp.eq.s32.totalorder %s21, 1
    %p191 = por %p189, %p190
    %p193 = scmp.ne.s32.totalorder %s178, %s192
    %p194 = scmp.eq.s32.totalorder %s21, 0
    %p195 = por %p193, %p194
    %s197 = sadd.s32 %s196, 1
    %p200 = scmp.eq.s32.totalorder %s15, 1
    %p201 = scmp.ne.s32.totalorder %s196, %s198
    %p202 = scmp.eq.s32.totalorder %s15, 0
    %p203 = por %p201, %p202
    %p204 = scmp.ne.s32.totalorder %s196, %s198
    %p205 = scmp.eq.s32.totalorder %s20, 1
    %p206 = por %p204, %p205
    %p207 = scmp.ne.s32.totalorder %s198, %s199
    %p208 = scmp.eq.s32.totalorder %s20, 0
    %p209 = por %p207, %p208
    %p210 = scmp.ne.s32.totalorder %s198, %s199
    %p211 = scmp.eq.s32.totalorder %s21, 1
    %p212 = por %p210, %p211
    %p214 = scmp.ne.s32.totalorder %s199, %s213
    %p215 = scmp.eq.s32.totalorder %s21, 0
    %p216 = por %p214, %p215
    %s217 = ssub.s32 %s15, %s22
    %p218 = scmp.eq.s32.totalorder %s217, 0
    %s220 = sadd.s32 %s219, 1
    %s221 = scalar_select %p218, %s219, %s220
    %p224 = pneg %p218
    %p225 = scmp.eq.s32.totalorder %s15, 1
    %p226 = por %p224, %p225
    %p227 = scmp.ne.s32.totalorder %s219, %s222
    %p228 = scmp.eq.s32.totalorder %s15, 0
    %p229 = por %p227, %p228
    %p230 = scmp.ne.s32.totalorder %s219, %s222
    %p231 = scmp.eq.s32.totalorder %s20, 1
    %p232 = por %p230, %p231
    %p233 = scmp.ne.s32.totalorder %s222, %s223
    %p234 = scmp.eq.s32.totalorder %s20, 0
    %p235 = por %p233, %p234
    %p236 = scmp.ne.s32.totalorder %s222, %s223
    %p237 = scmp.eq.s32.totalorder %s21, 1
    %p238 = por %p236, %p237
    %p240 = scmp.ne.s32.totalorder %s223, %s239
    %p241 = scmp.eq.s32.totalorder %s21, 0
    %p242 = por %p240, %p241
    %p243 = scmp.le.s32.totalorder 1, %s15
    %p244 = scmp.lt.s32.totalorder %s15, 3
    %p245 = pnand %p243, %p244
    %p246 = pneg %p245
    // Predicated region
    $region9: #{_mmg_forward_jit.1} parent=5 // pred_check
      _
    $region10: #{_mmg_forward_jit.1} parent=5 // pred_check_branch
      %248 = sbr.rel (%p245) target = $region12
    $region11: #{_mmg_forward_jit.1} parent=5 // pred_region
      %s249 = ssub.s32 %s15, 1
      // Predicated region
      $region13: #{_mmg_forward_jit.1} parent=11 // pred_check
        %p250 = pneg %p62
      $region14: #{_mmg_forward_jit.1} parent=11 // pred_check_branch
        %252 = sbr.rel (%p250) target = $region16
      $region15: #{_mmg_forward_jit.1} parent=11 // pred_region
        _
      $region16: #{_mmg_forward_jit.1} parent=11 // pred_fallthru
        _
      // Predicated region
      $region17: #{_mmg_forward_jit.1} parent=11 // pred_check
        %p253 = pneg %p83
      $region18: #{_mmg_forward_jit.1} parent=11 // pred_check_branch
        %255 = sbr.rel (%p253) target = $region20
      $region19: #{_mmg_forward_jit.1} parent=11 // pred_region
        _
      $region20: #{_mmg_forward_jit.1} parent=11 // pred_fallthru
        _
      // Predicated region
      $region21: #{_mmg_forward_jit.1} parent=11 // pred_check
        %p256 = pneg %p104
      $region22: #{_mmg_forward_jit.1} parent=11 // pred_check_branch
        %258 = sbr.rel (%p256) target = $region24
      $region23: #{_mmg_forward_jit.1} parent=11 // pred_region
        _
      $region24: #{_mmg_forward_jit.1} parent=11 // pred_fallthru
        _
      // Predicated region
      $region25: #{_mmg_forward_jit.1} parent=11 // pred_check
        %p259 = pneg %p125
      $region26: #{_mmg_forward_jit.1} parent=11 // pred_check_branch
        %261 = sbr.rel (%p259) target = $region28
      $region27: #{_mmg_forward_jit.1} parent=11 // pred_region
        _
      $region28: #{_mmg_forward_jit.1} parent=11 // pred_fallthru
        _
      // Predicated region
      $region29: #{_mmg_forward_jit.1} parent=11 // pred_check
        %p262 = pneg %p146
      $region30: #{_mmg_forward_jit.1} parent=11 // pred_check_branch
        %264 = sbr.rel (%p262) target = $region32
      $region31: #{_mmg_forward_jit.1} parent=11 // pred_region
        _
      $region32: #{_mmg_forward_jit.1} parent=11 // pred_fallthru
        _
      // Predicated region
      $region33: #{_mmg_forward_jit.1} parent=11 // pred_check
        %p265 = pneg %p167
      $region34: #{_mmg_forward_jit.1} parent=11 // pred_check_branch
        %267 = sbr.rel (%p265) target = $region36
      $region35: #{_mmg_forward_jit.1} parent=11 // pred_region
        _
      $region36: #{_mmg_forward_jit.1} parent=11 // pred_fallthru
        _
      // Predicated region
      $region37: #{_mmg_forward_jit.1} parent=11 // pred_check
        %p268 = pneg %p188
      $region38: #{_mmg_forward_jit.1} parent=11 // pred_check_branch
        %270 = sbr.rel (%p268) target = $region40
      $region39: #{_mmg_forward_jit.1} parent=11 // pred_region
        _
      $region40: #{_mmg_forward_jit.1} parent=11 // pred_fallthru
        _
      // Predicated region
      $region41: #{_mmg_forward_jit.1} parent=11 // pred_check
        %p271 = pneg %p209
      $region42: #{_mmg_forward_jit.1} parent=11 // pred_check_branch
        %273 = sbr.rel (%p271) target = $region44
      $region43: #{_mmg_forward_jit.1} parent=11 // pred_region
        _
      $region44: #{_mmg_forward_jit.1} parent=11 // pred_fallthru
        _
    $region12: #{_mmg_forward_jit.1} parent=5 // pred_fallthru
      _
    %p274 = scmp.lt.s32.totalorder %s15, 2
    // Predicated region
    $region45: #{_mmg_forward_jit.1} parent=5 // pred_check
      %p275 = pneg %p274
    $region46: #{_mmg_forward_jit.1} parent=5 // pred_check_branch
      %277 = sbr.rel (%p275) target = $region48
    $region47: #{_mmg_forward_jit.1} parent=5 // pred_region
      // Predicated region
      $region49: #{_mmg_forward_jit.1} parent=47 // pred_check
        %p278 = pneg %p35
      $region50: #{_mmg_forward_jit.1} parent=47 // pred_check_branch
        %280 = sbr.rel (%p278) target = $region52
      $region51: #{_mmg_forward_jit.1} parent=47 // pred_region
        %p281 = scmp.lt.s32.totalorder %s15, 1
        %s282 = scalar_select %p281, %s15, 1
        %s283 = smul.addr %s282, 16
        %s284 = smul.addr %s283, 8
        %s285 = scalar_lea.vmem %s0, %s284
      $region52: #{_mmg_forward_jit.1} parent=47 // pred_fallthru
        _
    $region48: #{_mmg_forward_jit.1} parent=5 // pred_fallthru
      _
    %p286 = scmp.le.s32.totalorder 1, %s15
    %p287 = scmp.lt.s32.totalorder %s15, 3
    %p288 = pnand %p286, %p287
    %p289 = pneg %p288
    // Predicated region
    $region53: #{_mmg_forward_jit.1} parent=5 // pred_check
      _
    $region54: #{_mmg_forward_jit.1} parent=5 // pred_check_branch
      %291 = sbr.rel (%p288) target = $region56
    $region55: #{_mmg_forward_jit.1} parent=5 // pred_region
      %s292 = ssub.s32 %s15, 1
      %p293 = scmp.lt.s32.totalorder %s20, 1
      %s294 = scalar_select %p293, %s20, 1
      %s295 = smul.addr %s294, 16
      %s296 = smul.addr %s295, 8
      %s297 = scalar_lea.vmem %s0, %s296
      %p298 = pneg %p41
      %p299 = pneg %p38
      %p300 = pneg %p62
      %p301 = pneg %p59
      %p302 = pneg %p83
      %p303 = pneg %p80
      %p304 = pneg %p104
      %p305 = pneg %p101
      %p306 = pneg %p125
      %p307 = pneg %p122
      %p308 = pneg %p146
      %p309 = pneg %p143
      %p310 = pneg %p167
      %p311 = pneg %p164
      %p312 = pneg %p188
      %p313 = pneg %p185
      %p314 = pneg %p209
      %p315 = pneg %p206
      %p316 = pneg %p235
      %p317 = pneg %p232
      %p318 = scmp.lt.s32.totalorder %s20, 1
      %s319 = scalar_select %p318, %s20, 1
      %s320 = smul.addr %s319, 4
      %s321 = smul.addr %s320, 8
      %s322 = scalar_lea.vmem %s9, %s321
      %p323 = scmp.lt.s32.totalorder %s20, 1
      %s324 = scalar_select %p323, %s20, 1
      %s325 = smul.addr %s324, 16
      %s326 = smul.addr %s325, 8
      %s327 = scalar_lea.vmem %s0, %s326
      %p328 = scmp.lt.s32.totalorder %s20, 1
      %s329 = scalar_select %p328, %s20, 1
      %s330 = smul.addr %s329, 4
      %s331 = smul.addr %s330, 8
      %s332 = scalar_lea.vmem %s9, %s331
      %v333 = vld [vmem:[%s327] sm:$0xff]
      %v334 = vld [vmem:[%s327 + $0x8] sm:$0xff]
      %v335 = vld [vmem:[%s327 + $0x10] sm:$0xff]
      %v336 = vld [vmem:[%s327 + $0x18] sm:$0xff]
      %v337 = vld [vmem:[%s327 + $0x20] sm:$0xff]
      %v338 = vld [vmem:[%s327 + $0x28] sm:$0xff]
      %v339 = vld [vmem:[%s327 + $0x30] sm:$0xff]
      %v340 = vld [vmem:[%s327 + $0x38] sm:$0xff]
      %v341 = vld [vmem:[%s327 + $0x40] sm:$0xff]
      %v342 = vld [vmem:[%s327 + $0x48] sm:$0xff]
      %v343 = vld [vmem:[%s327 + $0x50] sm:$0xff]
      %v344 = vld [vmem:[%s327 + $0x58] sm:$0xff]
      %v345 = vld [vmem:[%s327 + $0x60] sm:$0xff]
      %v346 = vld [vmem:[%s327 + $0x68] sm:$0xff]
      %v347 = vld [vmem:[%s327 + $0x70] sm:$0xff]
      %v348 = vld [vmem:[%s327 + $0x78] sm:$0xff]
      %v349 = vld [vmem:[%s1] sm:$0xff]
      %v350 = vld [vmem:[%s1 + $0x8] sm:$0xff]
      %v351 = vld [vmem:[%s1 + $0x10] sm:$0xff]
      %v352 = vld [vmem:[%s1 + $0x18] sm:$0xff]
      %v353 = vld [vmem:[%s1 + $0x20] sm:$0xff]
      %v354 = vld [vmem:[%s1 + $0x28] sm:$0xff]
      %vm355 = vcmask 523264
      %v357 = vsel %vm355, %v349, 0
      %v360 = vsel %vm355, %v350, 0
      %v363 = vsel %vm355, %v351, 0
      %v366 = vsel %vm355, %v352, 0
      %v369 = vsel %vm355, %v353, 0
      %v372 = vsel %vm355, %v354, 0
      %374 = vmatprep.subr.mxu0 %v334
      %375 = vmatpush1.msra.mxu0 %v333
      %376 = vmatprep.subr.mxu0 %v336
      %377 = vmatpush1.msra.mxu0 %v335
      %378 = vmatprep.subr.mxu0 %v338
      %379 = vmatpush1.msra.mxu0 %v337
      %380 = vmatprep.subr.mxu0 %v340
      %381 = vmatpush1.msra.mxu0 %v339
      %382 = vmatprep.subr.mxu0 %v342
      %383 = vmatpush1.msra.mxu0 %v341
      %384 = vmatprep.subr.mxu0 %v344
      %385 = vmatpush1.msra.mxu0 %v343
      %386 = vmatprep.subr.mxu0 %v346
      %387 = vmatpush1.msra.mxu0 %v345
      %388 = vmatprep.subr.mxu0 %v348
      %389 = vmatpush1.msra.mxu0 %v347
      %390 = vmatprep.subr.mxu0 0.0
      %391 = vmatpush1.msra.mxu0 0.0
      %392 = vmatprep.subr.mxu0 0.0
      %393 = vmatpush1.msra.mxu0 0.0
      %394 = vmatprep.subr.mxu0 0.0
      %395 = vmatpush1.msra.mxu0 0.0
      %396 = vmatprep.subr.mxu0 0.0
      %397 = vmatpush1.msra.mxu0 0.0
      %398 = vmatprep.subr.mxu0 0.0
      %399 = vmatpush1.msra.mxu0 0.0
      %400 = vmatprep.subr.mxu0 0.0
      %401 = vmatpush1.msra.mxu0 0.0
      %402 = vmatprep.subr.mxu0 0.0
      %403 = vmatpush1.msra.mxu0 0.0
      %404 = vmatprep.subr.mxu0 0.0
      %405 = vmatpush1.msra.mxu0 0.0
      %406 = vmatprep.subr.mxu0 0.0
      %407 = vmatpush1.msra.mxu0 0.0
      %408 = vmatprep.subr.mxu0 0.0
      %409 = vmatpush1.msra.mxu0 0.0
      %410 = vmatprep.subr.mxu0 0.0
      %411 = vmatpush1.msra.mxu0 0.0
      %412 = vmatprep.subr.mxu0 0.0
      %413 = vmatpush1.msra.mxu0 0.0
      %414 = vmatprep.subr.mxu0 0.0
      %415 = vmatpush1.msra.mxu0 0.0
      %416 = vmatprep.subr.mxu0 0.0
      %417 = vmatpush1.msra.mxu0 0.0
      %418 = vmatprep.subr.mxu0 0.0
      %419 = vmatpush1.msra.mxu0 0.0
      %420 = vmatprep.subr.mxu0 0.0
      %421 = vmatpush1.msra.mxu0 0.0
      %422 = vmatprep.subr.mxu0 0.0
      %423 = vmatpush1.msra.mxu0 0.0
      %424 = vmatprep.subr.mxu0 0.0
      %425 = vmatpush1.msra.mxu0 0.0
      %426 = vmatprep.subr.mxu0 0.0
      %427 = vmatpush1.msra.mxu0 0.0
      %428 = vmatprep.subr.mxu0 0.0
      %429 = vmatpush1.msra.mxu0 0.0
      %430 = vmatprep.subr.mxu0 0.0
      %431 = vmatpush1.msra.mxu0 0.0
      %432 = vmatprep.subr.mxu0 0.0
      %433 = vmatpush1.msra.mxu0 0.0
      %434 = vmatprep.subr.mxu0 0.0
      %435 = vmatpush1.msra.mxu0 0.0
      %436 = vmatprep.subr.mxu0 0.0
      %437 = vmatpush1.msra.mxu0 0.0
      %438 = vmatprep.mubr.f32.mxu0 0.0
      %439 = vmatmul.mubr.f32.gmra.mrb[0].mxu0 %v357
      %v440 = vpop.f32.mrb[0].mxu0
      %v441 = vadd.f32 0.0, %v440
      %v442 = vpop.f32.mrb[0].mxu0
      %v443 = vadd.f32 0.0, %v442
      %444 = vmatprep.mubr.f32.mxu0 0.0
      %445 = vmatmul.mubr.f32.gmra.mrb[0].mxu0 %v360
      %v446 = vpop.f32.mrb[0].mxu0
      %v447 = vadd.f32 0.0, %v446
      %v448 = vpop.f32.mrb[0].mxu0
      %v449 = vadd.f32 0.0, %v448
      %450 = vmatprep.mubr.f32.mxu0 0.0
      %451 = vmatmul.mubr.f32.gmra.mrb[0].mxu0 %v363
      %v452 = vpop.f32.mrb[0].mxu0
      %v453 = vadd.f32 0.0, %v452
      %v454 = vpop.f32.mrb[0].mxu0
      %v455 = vadd.f32 0.0, %v454
      %456 = vmatprep.mubr.f32.mxu0 0.0
      %457 = vmatmul.mubr.f32.gmra.mrb[0].mxu0 %v366
      %v458 = vpop.f32.mrb[0].mxu0
      %v459 = vadd.f32 0.0, %v458
      %v460 = vpop.f32.mrb[0].mxu0
      %v461 = vadd.f32 0.0, %v460
      %462 = vmatprep.mubr.f32.mxu0 0.0
      %463 = vmatmul.mubr.f32.gmra.mrb[0].mxu0 %v369
      %v464 = vpop.f32.mrb[0].mxu0
      %v465 = vadd.f32 0.0, %v464
      %v466 = vpop.f32.mrb[0].mxu0
      %v467 = vadd.f32 0.0, %v466
      %468 = vmatprep.mubr.f32.mxu0 0.0
      %469 = vmatmul.mubr.f32.gmra.mrb[0].mxu0 %v372
      %v470 = vpop.f32.mrb[0].mxu0
      %v471 = vadd.f32 0.0, %v470
      %v472 = vpop.f32.mrb[0].mxu0
      %v473 = vadd.f32 0.0, %v472
      %474 = vdwg.mxu0
      %v475 = vld [vmem:[%s4] sm:$0xff]
      %v476 = vld [vmem:[%s4 + $0x8] sm:$0xff]
      %v477 = vld [vmem:[%s4 + $0x10] sm:$0xff]
      %v478 = vld [vmem:[%s4 + $0x18] sm:$0xff]
      %v479 = vld [vmem:[%s5] sm:$0xff]
      %v480 = vld [vmem:[%s5 + $0x8] sm:$0xff]
      %v481 = vld [vmem:[%s5 + $0x10] sm:$0xff]
      %v482 = vld [vmem:[%s5 + $0x18] sm:$0xff]
      %v483 = vmul.f32 %v475, %v453
      %v484 = vmul.f32 %v476, %v455
      %v485 = vmul.f32 %v477, %v459
      %v486 = vmul.f32 %v478, %v461
      %v487 = vmul.f32 %v479, %v465
      %v488 = vmul.f32 %v480, %v467
      %v489 = vmul.f32 %v481, %v471
      %v490 = vmul.f32 %v482, %v473
      %v491 = vsub.f32 %v483, %v487
      %v492 = vsub.f32 %v484, %v488
      %v493 = vsub.f32 %v485, %v489
      %v494 = vsub.f32 %v486, %v490
      %v495 = vmul.f32 %v475, %v465
      %v496 = vmul.f32 %v476, %v467
      %v497 = vmul.f32 %v477, %v471
      %v498 = vmul.f32 %v478, %v473
      %v499 = vmul.f32 %v479, %v453
      %v500 = vmul.f32 %v480, %v455
      %v501 = vmul.f32 %v481, %v459
      %v502 = vmul.f32 %v482, %v461
      %v503 = vadd.f32 %v495, %v499
      %v504 = vadd.f32 %v496, %v500
      %v505 = vadd.f32 %v497, %v501
      %v506 = vadd.f32 %v498, %v502
      %v507 = vld [vmem:[%s2] sm:$0xff]
      %v508 = vld [vmem:[%s2 + $0x8] sm:$0xff]
      %v509 = vld [vmem:[%s3] sm:$0xff]
      %v510 = vld [vmem:[%s3 + $0x8] sm:$0xff]
      %vm511 = vcmask 130048
      %v513 = vsel %vm511, %v509, 0
      %v516 = vsel %vm511, %v510, 0
      %518 = vmatprep.subr.mxu0 %v504
      %519 = vmatpush1.msra.mxu0 %v503
      %520 = vmatprep.subr.mxu0 %v506
      %521 = vmatpush1.msra.mxu0 %v505
      %522 = vmatprep.subr.mxu0 0.0
      %523 = vmatpush1.msra.mxu0 0.0
      %524 = vmatprep.subr.mxu0 0.0
      %525 = vmatpush1.msra.mxu0 0.0
      %526 = vmatprep.subr.mxu0 0.0
      %527 = vmatpush1.msra.mxu0 0.0
      %528 = vmatprep.subr.mxu0 0.0
      %529 = vmatpush1.msra.mxu0 0.0
      %530 = vmatprep.subr.mxu0 0.0
      %531 = vmatpush1.msra.mxu0 0.0
      %532 = vmatprep.subr.mxu0 0.0
      %533 = vmatpush1.msra.mxu0 0.0
      %534 = vmatprep.subr.mxu0 0.0
      %535 = vmatpush1.msra.mxu0 0.0
      %536 = vmatprep.subr.mxu0 0.0
      %537 = vmatpush1.msra.mxu0 0.0
      %538 = vmatprep.subr.mxu0 0.0
      %539 = vmatpush1.msra.mxu0 0.0
      %540 = vmatprep.subr.mxu0 0.0
      %541 = vmatpush1.msra.mxu0 0.0
      %542 = vmatprep.subr.mxu0 0.0
      %543 = vmatpush1.msra.mxu0 0.0
      %544 = vmatprep.subr.mxu0 0.0
      %545 = vmatpush1.msra.mxu0 0.0
      %546 = vmatprep.subr.mxu0 0.0
      %547 = vmatpush1.msra.mxu0 0.0
      %548 = vmatprep.subr.mxu0 0.0
      %549 = vmatpush1.msra.mxu0 0.0
      %550 = vmatprep.subr.mxu0 0.0
      %551 = vmatpush1.msra.mxu0 0.0
      %552 = vmatprep.subr.mxu0 0.0
      %553 = vmatpush1.msra.mxu0 0.0
      %554 = vmatprep.subr.mxu0 0.0
      %555 = vmatpush1.msra.mxu0 0.0
      %556 = vmatprep.subr.mxu0 0.0
      %557 = vmatpush1.msra.mxu0 0.0
      %558 = vmatprep.subr.mxu0 0.0
      %559 = vmatpush1.msra.mxu0 0.0
      %560 = vmatprep.subr.mxu0 0.0
      %561 = vmatpush1.msra.mxu0 0.0
      %562 = vmatprep.subr.mxu0 0.0
      %563 = vmatpush1.msra.mxu0 0.0
      %564 = vmatprep.subr.mxu0 0.0
      %565 = vmatpush1.msra.mxu0 0.0
      %566 = vmatprep.subr.mxu0 0.0
      %567 = vmatpush1.msra.mxu0 0.0
      %568 = vmatprep.subr.mxu0 0.0
      %569 = vmatpush1.msra.mxu0 0.0
      %570 = vmatprep.subr.mxu0 0.0
      %571 = vmatpush1.msra.mxu0 0.0
      %572 = vmatprep.subr.mxu0 0.0
      %573 = vmatpush1.msra.mxu0 0.0
      %574 = vmatprep.subr.mxu0 0.0
      %575 = vmatpush1.msra.mxu0 0.0
      %576 = vmatprep.subr.mxu0 0.0
      %577 = vmatpush1.msra.mxu0 0.0
      %578 = vmatprep.subr.mxu0 0.0
      %579 = vmatpush1.msra.mxu0 0.0
      %580 = vmatprep.subr.mxu0 0.0
      %581 = vmatpush1.msra.mxu0 0.0
      %582 = vmatprep.mubr.f32.mxu0 0.0
      %583 = vmatmul.mubr.f32.gmra.mrb[0].mxu0 %v513
      %v584 = vpop.f32.mrb[0].mxu0
      %v585 = vadd.f32 0.0, %v584
      %v586 = vpop.f32.mrb[0].mxu0
      %v587 = vadd.f32 0.0, %v586
      %588 = vmatprep.mubr.f32.mxu0 0.0
      %589 = vmatmul.mubr.f32.gmra.mrb[0].mxu0 %v516
      %v590 = vpop.f32.mrb[0].mxu0
      %v591 = vadd.f32 0.0, %v590
      %v592 = vpop.f32.mrb[0].mxu0
      %v593 = vadd.f32 0.0, %v592
      %594 = vdwg.mxu0
      %v596 = vsel %vm511, %v507, 0
      %v599 = vsel %vm511, %v508, 0
      %601 = vmatprep.subr.mxu0 %v492
      %602 = vmatpush1.msra.mxu0 %v491
      %603 = vmatprep.subr.mxu0 %v494
      %604 = vmatpush1.msra.mxu0 %v493
      %605 = vmatprep.subr.mxu0 0.0
      %606 = vmatpush1.msra.mxu0 0.0
      %607 = vmatprep.subr.mxu0 0.0
      %608 = vmatpush1.msra.mxu0 0.0
      %609 = vmatprep.subr.mxu0 0.0
      %610 = vmatpush1.msra.mxu0 0.0
      %611 = vmatprep.subr.mxu0 0.0
      %612 = vmatpush1.msra.mxu0 0.0
      %613 = vmatprep.subr.mxu0 0.0
      %614 = vmatpush1.msra.mxu0 0.0
      %615 = vmatprep.subr.mxu0 0.0
      %616 = vmatpush1.msra.mxu0 0.0
      %617 = vmatprep.subr.mxu0 0.0
      %618 = vmatpush1.msra.mxu0 0.0
      %619 = vmatprep.subr.mxu0 0.0
      %620 = vmatpush1.msra.mxu0 0.0
      %621 = vmatprep.subr.mxu0 0.0
      %622 = vmatpush1.msra.mxu0 0.0
      %623 = vmatprep.subr.mxu0 0.0
      %624 = vmatpush1.msra.mxu0 0.0
      %625 = vmatprep.subr.mxu0 0.0
      %626 = vmatpush1.msra.mxu0 0.0
      %627 = vmatprep.subr.mxu0 0.0
      %628 = vmatpush1.msra.mxu0 0.0
      %629 = vmatprep.subr.mxu0 0.0
      %630 = vmatpush1.msra.mxu0 0.0
      %631 = vmatprep.subr.mxu0 0.0
      %632 = vmatpush1.msra.mxu0 0.0
      %633 = vmatprep.subr.mxu0 0.0
      %634 = vmatpush1.msra.mxu0 0.0
      %635 = vmatprep.subr.mxu0 0.0
      %636 = vmatpush1.msra.mxu0 0.0
      %637 = vmatprep.subr.mxu0 0.0
      %638 = vmatpush1.msra.mxu0 0.0
      %639 = vmatprep.subr.mxu0 0.0
      %640 = vmatpush1.msra.mxu0 0.0
      %641 = vmatprep.subr.mxu0 0.0
      %642 = vmatpush1.msra.mxu0 0.0
      %643 = vmatprep.subr.mxu0 0.0
      %644 = vmatpush1.msra.mxu0 0.0
      %645 = vmatprep.subr.mxu0 0.0
      %646 = vmatpush1.msra.mxu0 0.0
      %647 = vmatprep.subr.mxu0 0.0
      %648 = vmatpush1.msra.mxu0 0.0
      %649 = vmatprep.subr.mxu0 0.0
      %650 = vmatpush1.msra.mxu0 0.0
      %651 = vmatprep.subr.mxu0 0.0
      %652 = vmatpush1.msra.mxu0 0.0
      %653 = vmatprep.subr.mxu0 0.0
      %654 = vmatpush1.msra.mxu0 0.0
      %655 = vmatprep.subr.mxu0 0.0
      %656 = vmatpush1.msra.mxu0 0.0
      %657 = vmatprep.subr.mxu0 0.0
      %658 = vmatpush1.msra.mxu0 0.0
      %659 = vmatprep.subr.mxu0 0.0
      %660 = vmatpush1.msra.mxu0 0.0
      %661 = vmatprep.subr.mxu0 0.0
      %662 = vmatpush1.msra.mxu0 0.0
      %663 = vmatprep.subr.mxu0 0.0
      %664 = vmatpush1.msra.mxu0 0.0
      %665 = vmatprep.mubr.f32.mxu0 0.0
      %666 = vmatmul.mubr.f32.gmra.mrb[0].mxu0 %v596
      %v667 = vpop.f32.mrb[0].mxu0
      %v668 = vadd.f32 %v585, %v667
      %v669 = vpop.f32.mrb[0].mxu0
      %v670 = vadd.f32 %v587, %v669
      %671 = vmatprep.mubr.f32.mxu0 0.0
      %672 = vmatmul.mubr.f32.gmra.mrb[0].mxu0 %v599
      %v673 = vpop.f32.mrb[0].mxu0
      %v674 = vadd.f32 %v591, %v673
      %v675 = vpop.f32.mrb[0].mxu0
      %v676 = vadd.f32 %v593, %v675
      %677 = vdwg.mxu0
      %v678 = vadd.f32 %v441, %v668
      %v679 = vadd.f32 %v443, %v670
      %v680 = vadd.f32 %v447, %v674
      %v681 = vadd.f32 %v449, %v676
      %v682 = vld [vmem:[%s6] sm:$0xff]
      %v683 = vld [vmem:[%s6 + $0x8] sm:$0xff]
      %v684 = vld [vmem:[%s6 + $0x10] sm:$0xff]
      %v685 = vld [vmem:[%s6 + $0x18] sm:$0xff]
      %v686 = vld [vmem:[%s6 + $0x20] sm:$0xff]
      %v687 = vld [vmem:[%s6 + $0x28] sm:$0xff]
      %v688 = vld [vmem:[%s6 + $0x30] sm:$0xff]
      %v689 = vld [vmem:[%s6 + $0x38] sm:$0xff]
      %v690 = vld [vmem:[%s6 + $0x40] sm:$0xff]
      %v691 = vld [vmem:[%s6 + $0x48] sm:$0xff]
      %v692 = vld [vmem:[%s6 + $0x50] sm:$0xff]
      %v693 = vld [vmem:[%s6 + $0x58] sm:$0xff]
      %v694 = vld [vmem:[%s6 + $0x60] sm:$0xff]
      %v695 = vld [vmem:[%s6 + $0x68] sm:$0xff]
      %v696 = vld [vmem:[%s6 + $0x70] sm:$0xff]
      %v697 = vld [vmem:[%s6 + $0x78] sm:$0xff]
      %v698 = vld [vmem:[%s6 + $0x80] sm:$0xff]
      %v699 = vld [vmem:[%s6 + $0x88] sm:$0xff]
      %v700 = vld [vmem:[%s6 + $0x90] sm:$0xff]
      %v701 = vld [vmem:[%s6 + $0x98] sm:$0xff]
      %v702 = vld [vmem:[%s6 + $0xa0] sm:$0xff]
      %v703 = vld [vmem:[%s6 + $0xa8] sm:$0xff]
      %v704 = vld [vmem:[%s6 + $0xb0] sm:$0xff]
      %v705 = vld [vmem:[%s6 + $0xb8] sm:$0xff]
      %v706 = vld [vmem:[%s6 + $0xc0] sm:$0xff]
      %v707 = vld [vmem:[%s6 + $0xc8] sm:$0xff]
      %v708 = vld [vmem:[%s6 + $0xd0] sm:$0xff]
      %v709 = vld [vmem:[%s6 + $0xd8] sm:$0xff]
      %v710 = vld [vmem:[%s6 + $0xe0] sm:$0xff]
      %v711 = vld [vmem:[%s6 + $0xe8] sm:$0xff]
      %v712 = vld [vmem:[%s6 + $0xf0] sm:$0xff]
      %v713 = vld [vmem:[%s6 + $0xf8] sm:$0xff]
      %v714 = vld [vmem:[%s6 + $0x100] sm:$0xff]
      %v715 = vld [vmem:[%s6 + $0x108] sm:$0xff]
      %v716 = vld [vmem:[%s6 + $0x110] sm:$0xff]
      %v717 = vld [vmem:[%s6 + $0x118] sm:$0xff]
      %v718 = vld [vmem:[%s6 + $0x120] sm:$0xff]
      %v719 = vld [vmem:[%s6 + $0x128] sm:$0xff]
      %v720 = vld [vmem:[%s6 + $0x130] sm:$0xff]
      %v721 = vld [vmem:[%s6 + $0x138] sm:$0xff]
      %v722 = vld [vmem:[%s6 + $0x140] sm:$0xff]
      %v723 = vld [vmem:[%s6 + $0x148] sm:$0xff]
      %v724 = vld [vmem:[%s6 + $0x150] sm:$0xff]
      %v725 = vld [vmem:[%s6 + $0x158] sm:$0xff]
      %v726 = vld [vmem:[%s6 + $0x160] sm:$0xff]
      %v727 = vld [vmem:[%s6 + $0x168] sm:$0xff]
      %v728 = vld [vmem:[%s6 + $0x170] sm:$0xff]
      %v729 = vld [vmem:[%s6 + $0x178] sm:$0xff]
      %v730 = vld [vmem:[%s6 + $0x180] sm:$0xff]
      %v731 = vld [vmem:[%s6 + $0x188] sm:$0xff]
      %v732 = vld [vmem:[%s6 + $0x190] sm:$0xff]
      %v733 = vld [vmem:[%s6 + $0x198] sm:$0xff]
      %v734 = vld [vmem:[%s6 + $0x1a0] sm:$0xff]
      %v735 = vld [vmem:[%s6 + $0x1a8] sm:$0xff]
      %v736 = vld [vmem:[%s6 + $0x1b0] sm:$0xff]
      %v737 = vld [vmem:[%s6 + $0x1b8] sm:$0xff]
      %v738 = vld [vmem:[%s6 + $0x1c0] sm:$0xff]
      %v739 = vld [vmem:[%s6 + $0x1c8] sm:$0xff]
      %v740 = vld [vmem:[%s6 + $0x1d0] sm:$0xff]
      %v741 = vld [vmem:[%s6 + $0x1d8] sm:$0xff]
      %v742 = vld [vmem:[%s6 + $0x1e0] sm:$0xff]
      %v743 = vld [vmem:[%s6 + $0x1e8] sm:$0xff]
      %v744 = vld [vmem:[%s6 + $0x1f0] sm:$0xff]
      %v745 = vld [vmem:[%s6 + $0x1f8] sm:$0xff]
      %746 = vmatprep.subr.mxu0 %v683
      %747 = vmatpush1.msra.mxu0 %v682
      %748 = vmatprep.subr.mxu0 %v685
      %749 = vmatpush1.msra.mxu0 %v684
      %750 = vmatprep.subr.mxu0 %v687
      %751 = vmatpush1.msra.mxu0 %v686
      %752 = vmatprep.subr.mxu0 %v689
      %753 = vmatpush1.msra.mxu0 %v688
      %754 = vmatprep.subr.mxu0 %v691
      %755 = vmatpush1.msra.mxu0 %v690
      %756 = vmatprep.subr.mxu0 %v693
      %757 = vmatpush1.msra.mxu0 %v692
      %758 = vmatprep.subr.mxu0 %v695
      %759 = vmatpush1.msra.mxu0 %v694
      %760 = vmatprep.subr.mxu0 %v697
      %761 = vmatpush1.msra.mxu0 %v696
      %762 = vmatprep.subr.mxu0 %v699
      %763 = vmatpush1.msra.mxu0 %v698
      %764 = vmatprep.subr.mxu0 %v701
      %765 = vmatpush1.msra.mxu0 %v700
      %766 = vmatprep.subr.mxu0 %v703
      %767 = vmatpush1.msra.mxu0 %v702
      %768 = vmatprep.subr.mxu0 %v705
      %769 = vmatpush1.msra.mxu0 %v704
      %770 = vmatprep.subr.mxu0 %v707
      %771 = vmatpush1.msra.mxu0 %v706
      %772 = vmatprep.subr.mxu0 %v709
      %773 = vmatpush1.msra.mxu0 %v708
      %774 = vmatprep.subr.mxu0 %v711
      %775 = vmatpush1.msra.mxu0 %v710
      %776 = vmatprep.subr.mxu0 %v713
      %777 = vmatpush1.msra.mxu0 %v712
      %778 = vmatprep.subr.mxu0 %v715
      %779 = vmatpush1.msra.mxu0 %v714
      %780 = vmatprep.subr.mxu0 %v717
      %781 = vmatpush1.msra.mxu0 %v716
      %782 = vmatprep.subr.mxu0 %v719
      %783 = vmatpush1.msra.mxu0 %v718
      %784 = vmatprep.subr.mxu0 %v721
      %785 = vmatpush1.msra.mxu0 %v720
      %786 = vmatprep.subr.mxu0 %v723
      %787 = vmatpush1.msra.mxu0 %v722
      %788 = vmatprep.subr.mxu0 %v725
      %789 = vmatpush1.msra.mxu0 %v724
      %790 = vmatprep.subr.mxu0 %v727
      %791 = vmatpush1.msra.mxu0 %v726
      %792 = vmatprep.subr.mxu0 %v729
      %793 = vmatpush1.msra.mxu0 %v728
      %794 = vmatprep.subr.mxu0 %v731
      %795 = vmatpush1.msra.mxu0 %v730
      %796 = vmatprep.subr.mxu0 %v733
      %797 = vmatpush1.msra.mxu0 %v732
      %798 = vmatprep.subr.mxu0 %v735
      %799 = vmatpush1.msra.mxu0 %v734
      %800 = vmatprep.subr.mxu0 %v737
      %801 = vmatpush1.msra.mxu0 %v736
      %802 = vmatprep.subr.mxu0 %v739
      %803 = vmatpush1.msra.mxu0 %v738
      %804 = vmatprep.subr.mxu0 %v741
      %805 = vmatpush1.msra.mxu0 %v740
      %806 = vmatprep.subr.mxu0 %v743
      %807 = vmatpush1.msra.mxu0 %v742
      %808 = vmatprep.subr.mxu0 %v745
      %809 = vmatpush1.msra.mxu0 %v744
      %810 = vmatprep.mubr.f32.mxu0 %v679
      %811 = vmatmul.mubr.f32.gmra.mrb[0].mxu0 %v678
      %v812 = vpop.f32.mrb[0].mxu0
      %v813 = vadd.f32 0.0, %v812
      %v814 = vpop.f32.mrb[0].mxu0
      %v815 = vadd.f32 0.0, %v814
      %816 = vmatprep.mubr.f32.mxu0 %v681
      %817 = vmatmul.mubr.f32.gmra.mrb[0].mxu0 %v680
      %v818 = vpop.f32.mrb[0].mxu0
      %v819 = vadd.f32 0.0, %v818
      %v820 = vpop.f32.mrb[0].mxu0
      %v821 = vadd.f32 0.0, %v820
      %822 = vdwg.mxu0
      %v823 = vsub.f32 %v678, %v813
      %v824 = vsub.f32 %v679, %v815
      %v825 = vsub.f32 %v680, %v819
      %v826 = vsub.f32 %v681, %v821
      %v827 = vmul.f32 %v823, %v823
      %v828 = vmul.f32 %v824, %v824
      %v829 = vmul.f32 %v825, %v825
      %v830 = vmul.f32 %v826, %v826
      %831 = vmatprep.subr.mxu0 %v683
      %832 = vmatpush1.msra.mxu0 %v682
      %833 = vmatprep.subr.mxu0 %v685
      %834 = vmatpush1.msra.mxu0 %v684
      %835 = vmatprep.subr.mxu0 %v687
      %836 = vmatpush1.msra.mxu0 %v686
      %837 = vmatprep.subr.mxu0 %v689
      %838 = vmatpush1.msra.mxu0 %v688
      %839 = vmatprep.subr.mxu0 %v691
      %840 = vmatpush1.msra.mxu0 %v690
      %841 = vmatprep.subr.mxu0 %v693
      %842 = vmatpush1.msra.mxu0 %v692
      %843 = vmatprep.subr.mxu0 %v695
      %844 = vmatpush1.msra.mxu0 %v694
      %845 = vmatprep.subr.mxu0 %v697
      %846 = vmatpush1.msra.mxu0 %v696
      %847 = vmatprep.subr.mxu0 %v699
      %848 = vmatpush1.msra.mxu0 %v698
      %849 = vmatprep.subr.mxu0 %v701
      %850 = vmatpush1.msra.mxu0 %v700
      %851 = vmatprep.subr.mxu0 %v703
      %852 = vmatpush1.msra.mxu0 %v702
      %853 = vmatprep.subr.mxu0 %v705
      %854 = vmatpush1.msra.mxu0 %v704
      %855 = vmatprep.subr.mxu0 %v707
      %856 = vmatpush1.msra.mxu0 %v706
      %857 = vmatprep.subr.mxu0 %v709
      %858 = vmatpush1.msra.mxu0 %v708
      %859 = vmatprep.subr.mxu0 %v711
      %860 = vmatpush1.msra.mxu0 %v710
      %861 = vmatprep.subr.mxu0 %v713
      %862 = vmatpush1.msra.mxu0 %v712
      %863 = vmatprep.subr.mxu0 %v715
      %864 = vmatpush1.msra.mxu0 %v714
      %865 = vmatprep.subr.mxu0 %v717
      %866 = vmatpush1.msra.mxu0 %v716
      %867 = vmatprep.subr.mxu0 %v719
      %868 = vmatpush1.msra.mxu0 %v718
      %869 = vmatprep.subr.mxu0 %v721
      %870 = vmatpush1.msra.mxu0 %v720
      %871 = vmatprep.subr.mxu0 %v723
      %872 = vmatpush1.msra.mxu0 %v722
      %873 = vmatprep.subr.mxu0 %v725
      %874 = vmatpush1.msra.mxu0 %v724
      %875 = vmatprep.subr.mxu0 %v727
      %876 = vmatpush1.msra.mxu0 %v726
      %877 = vmatprep.subr.mxu0 %v729
      %878 = vmatpush1.msra.mxu0 %v728
      %879 = vmatprep.subr.mxu0 %v731
      %880 = vmatpush1.msra.mxu0 %v730
      %881 = vmatprep.subr.mxu0 %v733
      %882 = vmatpush1.msra.mxu0 %v732
      %883 = vmatprep.subr.mxu0 %v735
      %884 = vmatpush1.msra.mxu0 %v734
      %885 = vmatprep.subr.mxu0 %v737
      %886 = vmatpush1.msra.mxu0 %v736
      %887 = vmatprep.subr.mxu0 %v739
      %888 = vmatpush1.msra.mxu0 %v738
      %889 = vmatprep.subr.mxu0 %v741
      %890 = vmatpush1.msra.mxu0 %v740
      %891 = vmatprep.subr.mxu0 %v743
      %892 = vmatpush1.msra.mxu0 %v742
      %893 = vmatprep.subr.mxu0 %v745
      %894 = vmatpush1.msra.mxu0 %v744
      %895 = vmatprep.mubr.f32.mxu0 %v828
      %896 = vmatmul.mubr.f32.gmra.mrb[0].mxu0 %v827
      %v897 = vpop.f32.mrb[0].mxu0
      %v898 = vadd.f32 1e-05, %v897
      %v899 = vpop.f32.mrb[0].mxu0
      %v900 = vadd.f32 1e-05, %v899
      %901 = vmatprep.mubr.f32.mxu0 %v830
      %902 = vmatmul.mubr.f32.gmra.mrb[0].mxu0 %v829
      %v903 = vpop.f32.mrb[0].mxu0
      %v904 = vadd.f32 1e-05, %v903
      %v905 = vpop.f32.mrb[0].mxu0
      %v906 = vadd.f32 1e-05, %v905
      %907 = vdwg.mxu0
      %v908 = vrsqrt.pop %v898
      %v909 = vrsqrt.pop %v900
      %v910 = vrsqrt.pop %v904
      %v911 = vrsqrt.pop %v906
      %v912 = vmul.f32 %v823, %v908
      %v913 = vmul.f32 %v824, %v909
      %v914 = vmul.f32 %v825, %v910
      %v915 = vmul.f32 %v826, %v911
      %v916 = vld [vmem:[%s7] sm:$0xff]
      %v917 = vld [vmem:[%s7 + $0x8] sm:$0xff]
      %v918 = vld [vmem:[%s7 + $0x10] sm:$0xff]
      %v919 = vld [vmem:[%s7 + $0x18] sm:$0xff]
      %v920 = vld [vmem:[%s7 + $0x20] sm:$0xff]
      %v921 = vld [vmem:[%s7 + $0x28] sm:$0xff]
      %v922 = vld [vmem:[%s7 + $0x30] sm:$0xff]
      %v923 = vld [vmem:[%s7 + $0x38] sm:$0xff]
      %v924 = vld [vmem:[%s7 + $0x40] sm:$0xff]
      %v925 = vld [vmem:[%s7 + $0x48] sm:$0xff]
      %v926 = vld [vmem:[%s7 + $0x50] sm:$0xff]
      %v927 = vld [vmem:[%s7 + $0x58] sm:$0xff]
      %v928 = vld [vmem:[%s7 + $0x60] sm:$0xff]
      %v929 = vld [vmem:[%s7 + $0x68] sm:$0xff]
      %v930 = vld [vmem:[%s7 + $0x70] sm:$0xff]
      %v931 = vld [vmem:[%s7 + $0x78] sm:$0xff]
      %v932 = vld [vmem:[%s7 + $0x80] sm:$0xff]
      %v933 = vld [vmem:[%s7 + $0x88] sm:$0xff]
      %v934 = vld [vmem:[%s7 + $0x90] sm:$0xff]
      %v935 = vld [vmem:[%s7 + $0x98] sm:$0xff]
      %v936 = vld [vmem:[%s7 + $0xa0] sm:$0xff]
      %v937 = vld [vmem:[%s7 + $0xa8] sm:$0xff]
      %v938 = vld [vmem:[%s7 + $0xb0] sm:$0xff]
      %v939 = vld [vmem:[%s7 + $0xb8] sm:$0xff]
      %v940 = vld [vmem:[%s7 + $0xc0] sm:$0xff]
      %v941 = vld [vmem:[%s7 + $0xc8] sm:$0xff]
      %v942 = vld [vmem:[%s7 + $0xd0] sm:$0xff]
      %v943 = vld [vmem:[%s7 + $0xd8] sm:$0xff]
      %v944 = vld [vmem:[%s7 + $0xe0] sm:$0xff]
      %v945 = vld [vmem:[%s7 + $0xe8] sm:$0xff]
      %v946 = vld [vmem:[%s7 + $0xf0] sm:$0xff]
      %v947 = vld [vmem:[%s7 + $0xf8] sm:$0xff]
      %v948 = vld [vmem:[%s7 + $0x100] sm:$0xff]
      %v949 = vld [vmem:[%s7 + $0x108] sm:$0xff]
      %v950 = vld [vmem:[%s7 + $0x110] sm:$0xff]
      %v951 = vld [vmem:[%s7 + $0x118] sm:$0xff]
      %v952 = vld [vmem:[%s7 + $0x120] sm:$0xff]
      %v953 = vld [vmem:[%s7 + $0x128] sm:$0xff]
      %v954 = vld [vmem:[%s7 + $0x130] sm:$0xff]
      %v955 = vld [vmem:[%s7 + $0x138] sm:$0xff]
      %v956 = vld [vmem:[%s7 + $0x140] sm:$0xff]
      %v957 = vld [vmem:[%s7 + $0x148] sm:$0xff]
      %v958 = vld [vmem:[%s7 + $0x150] sm:$0xff]
      %v959 = vld [vmem:[%s7 + $0x158] sm:$0xff]
      %v960 = vld [vmem:[%s7 + $0x160] sm:$0xff]
      %v961 = vld [vmem:[%s7 + $0x168] sm:$0xff]
      %v962 = vld [vmem:[%s7 + $0x170] sm:$0xff]
      %v963 = vld [vmem:[%s7 + $0x178] sm:$0xff]
      %v964 = vld [vmem:[%s7 + $0x180] sm:$0xff]
      %v965 = vld [vmem:[%s7 + $0x188] sm:$0xff]
      %v966 = vld [vmem:[%s7 + $0x190] sm:$0xff]
      %v967 = vld [vmem:[%s7 + $0x198] sm:$0xff]
      %v968 = vld [vmem:[%s7 + $0x1a0] sm:$0xff]
      %v969 = vld [vmem:[%s7 + $0x1a8] sm:$0xff]
      %v970 = vld [vmem:[%s7 + $0x1b0] sm:$0xff]
      %v971 = vld [vmem:[%s7 + $0x1b8] sm:$0xff]
      %v972 = vld [vmem:[%s7 + $0x1c0] sm:$0xff]
      %v973 = vld [vmem:[%s7 + $0x1c8] sm:$0xff]
      %v974 = vld [vmem:[%s7 + $0x1d0] sm:$0xff]
      %v975 = vld [vmem:[%s7 + $0x1d8] sm:$0xff]
      %v976 = vld [vmem:[%s7 + $0x1e0] sm:$0xff]
      %v977 = vld [vmem:[%s7 + $0x1e8] sm:$0xff]
      %v978 = vld [vmem:[%s7 + $0x1f0] sm:$0xff]
      %v979 = vld [vmem:[%s7 + $0x1f8] sm:$0xff]
      %v980 = vld [vmem:[%s8] sm:$0x3]
      %v982 = vlaneseq
      %v983 = vshrl.u32 %v982, 7
      %v984 = vsub.s32 0, %v983
      %v985 = vrot.slane %v980, %v984
      %v986 = vlaneseq
      %v987 = vshrl.u32 %v986, 7
      %v988 = vsub.s32 1, %v987
      %v989 = vrot.slane %v980, %v988
      %992 = vmatprep.subr.mxu0 %v917
      %993 = vmatpush1.msra.mxu0 %v916
      %994 = vmatprep.subr.mxu0 %v919
      %995 = vmatpush1.msra.mxu0 %v918
      %996 = vmatprep.subr.mxu0 %v921
      %997 = vmatpush1.msra.mxu0 %v920
      %998 = vmatprep.subr.mxu0 %v923
      %999 = vmatpush1.msra.mxu0 %v922
      %1000 = vmatprep.subr.mxu0 %v925
      %1001 = vmatpush1.msra.mxu0 %v924
      %1002 = vmatprep.subr.mxu0 %v927
      %1003 = vmatpush1.msra.mxu0 %v926
      %1004 = vmatprep.subr.mxu0 %v929
      %1005 = vmatpush1.msra.mxu0 %v928
      %1006 = vmatprep.subr.mxu0 %v931
      %1007 = vmatpush1.msra.mxu0 %v930
      %1008 = vmatprep.subr.mxu0 %v933
      %1009 = vmatpush1.msra.mxu0 %v932
      %1010 = vmatprep.subr.mxu0 %v935
      %1011 = vmatpush1.msra.mxu0 %v934
      %1012 = vmatprep.subr.mxu0 %v937
      %1013 = vmatpush1.msra.mxu0 %v936
      %1014 = vmatprep.subr.mxu0 %v939
      %1015 = vmatpush1.msra.mxu0 %v938
      %1016 = vmatprep.subr.mxu0 %v941
      %1017 = vmatpush1.msra.mxu0 %v940
      %1018 = vmatprep.subr.mxu0 %v943
      %1019 = vmatpush1.msra.mxu0 %v942
      %1020 = vmatprep.subr.mxu0 %v945
      %1021 = vmatpush1.msra.mxu0 %v944
      %1022 = vmatprep.subr.mxu0 %v947
      %1023 = vmatpush1.msra.mxu0 %v946
      %1024 = vmatprep.subr.mxu0 %v949
      %1025 = vmatpush1.msra.mxu0 %v948
      %1026 = vmatprep.subr.mxu0 %v951
      %1027 = vmatpush1.msra.mxu0 %v950
      %1028 = vmatprep.subr.mxu0 %v953
      %1029 = vmatpush1.msra.mxu0 %v952
      %1030 = vmatprep.subr.mxu0 %v955
      %1031 = vmatpush1.msra.mxu0 %v954
      %1032 = vmatprep.subr.mxu0 %v957
      %1033 = vmatpush1.msra.mxu0 %v956
      %1034 = vmatprep.subr.mxu0 %v959
      %1035 = vmatpush1.msra.mxu0 %v958
      %1036 = vmatprep.subr.mxu0 %v961
      %1037 = vmatpush1.msra.mxu0 %v960
      %1038 = vmatprep.subr.mxu0 %v963
      %1039 = vmatpush1.msra.mxu0 %v962
      %1040 = vmatprep.subr.mxu0 %v965
      %1041 = vmatpush1.msra.mxu0 %v964
      %1042 = vmatprep.subr.mxu0 %v967
      %1043 = vmatpush1.msra.mxu0 %v966
      %1044 = vmatprep.subr.mxu0 %v969
      %1045 = vmatpush1.msra.mxu0 %v968
      %1046 = vmatprep.subr.mxu0 %v971
      %1047 = vmatpush1.msra.mxu0 %v970
      %1048 = vmatprep.subr.mxu0 %v973
      %1049 = vmatpush1.msra.mxu0 %v972
      %1050 = vmatprep.subr.mxu0 %v975
      %1051 = vmatpush1.msra.mxu0 %v974
      %1052 = vmatprep.subr.mxu0 %v977
      %1053 = vmatpush1.msra.mxu0 %v976
      %1054 = vmatprep.subr.mxu0 %v979
      %1055 = vmatpush1.msra.mxu0 %v978
      %1056 = vmatprep.mubr.f32.mxu0 %v913
      %1057 = vmatmul.mubr.f32.gmra.mrb[0].mxu0 %v912
      %v1058 = vpop.f32.mrb[0].mxu0
      %v1059 = vadd.f32 %v985, %v1058
      %v1060 = vpop.f32.mrb[0].mxu0
      %v1061 = vadd.f32 %v989, %v1060
      %1062 = vmatprep.mubr.f32.mxu0 %v915
      %1063 = vmatmul.mubr.f32.gmra.mrb[0].mxu0 %v914
      %v1064 = vpop.f32.mrb[0].mxu0
      %v1065 = vadd.f32 %v985, %v1064
      %v1066 = vpop.f32.mrb[0].mxu0
      %v1067 = vadd.f32 %v989, %v1066
      %1068 = vdwg.mxu0
      %1069 = vst [vmem:[%s332] sm:$0xff] %v1059
      %1070 = vst [vmem:[%s332 + $0x8] sm:$0xff] %v1061
      %1071 = vst [vmem:[%s332 + $0x10] sm:$0xff] %v1065
      %1072 = vst [vmem:[%s332 + $0x18] sm:$0xff] %v1067
      %p1073 = scmp.lt.s32.totalorder %s20, 1
      %s1074 = scalar_select %p1073, %s20, 1
      %s1075 = smul.addr %s1074, 4
      %s1076 = smul.addr %s1075, 8
      %s1077 = scalar_lea.vmem %s9, %s1076
      // Predicated region
      $region57: #{_mmg_forward_jit.1} parent=55 // pred_check
        %p1078 = pneg %p232
      $region58: #{_mmg_forward_jit.1} parent=55 // pred_check_branch
        %1080 = sbr.rel (%p1078) target = $region60
      $region59: #{_mmg_forward_jit.1} parent=55 // pred_region
        _
      $region60: #{_mmg_forward_jit.1} parent=55 // pred_fallthru
        _
    $region56: #{_mmg_forward_jit.1} parent=5 // pred_fallthru
      _
    %p1081 = scmp.le.s32.totalorder 2, %s15
    // Predicated region
    $region61: #{_mmg_forward_jit.1} parent=5 // pred_check
      %p1082 = pneg %p1081
    $region62: #{_mmg_forward_jit.1} parent=5 // pred_check_branch
      %1084 = sbr.rel (%p1082) target = $region64
    $region63: #{_mmg_forward_jit.1} parent=5 // pred_region
      %s1085 = ssub.s32 %s15, 2
      // Predicated region
      $region65: #{_mmg_forward_jit.1} parent=63 // pred_check
        %p1086 = pneg %p238
      $region66: #{_mmg_forward_jit.1} parent=63 // pred_check_branch
        %1088 = sbr.rel (%p1086) target = $region68
      $region67: #{_mmg_forward_jit.1} parent=63 // pred_region
        %p1089 = scmp.lt.s32.totalorder %s21, 1
        %s1090 = scalar_select %p1089, %s21, 1
        %s1091 = smul.addr %s1090, 4
        %s1092 = smul.addr %s1091, 8
        %s1093 = scalar_lea.vmem %s9, %s1092
      $region68: #{_mmg_forward_jit.1} parent=63 // pred_fallthru
        _
    $region64: #{_mmg_forward_jit.1} parent=5 // pred_fallthru
      _
  $region6: #{_mmg_forward_jit.1} parent=0 // loop_footer
    %s19 = sadd.s32 1, %s15
  $region7: #{_mmg_forward_jit.1} parent=0 // loop_footer_branch
    %14 = sbr.rel target = $region3
  $region8: #{_mmg_forward_jit.1} parent=0 // loop_exit
    _

// kernel: _mmg_forward_jit.1
$region0: #{_mmg_forward_jit.1}
  #allocation0 [shape = 'u32[]', space=smem, size = 0x4, offset = 0x4, fixed_abs, tag = 'smem constant byte address 0x4 - core index']
  #allocation1 [shape = 'u32[144,128]{1,0:T(1,128)}', space=vmem, size = 0x12000, scoped, tag = 'internal scratch']
  %s0 = inlined_call_operand.vmem [shape: f32[2,64,256], index: 0, kind: input, shape index: {}]
  %s1 = inlined_call_operand.vmem [shape: f32[48,64], index: 1, kind: input, shape index: {}]
  %s2 = inlined_call_operand.vmem [shape: f32[16,16], index: 2, kind: input, shape index: {}]
  %s3 = inlined_call_operand.vmem [shape: f32[16,16], index: 3, kind: input, shape index: {}]
  %s4 = inlined_call_operand.vmem [shape: f32[16,256], index: 4, kind: input, shape index: {}]
  %s5 = inlined_call_operand.vmem [shape: f32[16,256], index: 5, kind: input, shape index: {}]
  %s6 = inlined_call_operand.vmem [shape: f32[256,256], index: 6, kind: input, shape index: {}]
  %s7 = inlined_call_operand.vmem [shape: f32[256,256], index: 7, kind: input, shape index: {}]
  %s8 = inlined_call_operand.vmem [shape: f32[1,256], index: 8, kind: input, shape index: {}]
  %s9 = inlined_call_operand.vmem [shape: f32[2,16,256], index: 9, kind: output, shape index: {}]
  %s10 = sld [smem:[#allocation0]]
  $region69: #{_mmg_forward_jit.1} parent=0
    _
  %s12 = ssub.s32 1, %s10
  %s13 = scalar_select 0, %s12, %s10
  loop: start=0, step=1, limit=4
  $region2: #{_mmg_forward_jit.1} parent=0 // loop_pre_header
    _
  $region3: #{_mmg_forward_jit.1} parent=0 // loop_header
    %s15 = sphi 0, %s19
    %p16 = scmp.ge.s32.totalorder %s15, 4
    %s25 = sphi 0, %s27
    %s28 = sphi 0, %s25
    %s29 = sphi 0, %s28
    %s45 = sphi 0, %s29
    %s49 = sphi 0, %s49
    %s51 = sphi 0, %s49
    %s52 = sphi 0, %s51
    %s66 = sphi 0, %s52
    %s70 = sphi 0, %s70
    %s72 = sphi 0, %s70
    %s73 = sphi 0, %s72
    %s87 = sphi 0, %s73
    %s91 = sphi 0, %s91
    %s93 = sphi 0, %s91
    %s94 = sphi 0, %s93
    %s108 = sphi 0, %s94
    %s112 = sphi 0, %s112
    %s114 = sphi 0, %s112
    %s115 = sphi 0, %s114
    %s129 = sphi 0, %s115
    %s133 = sphi 0, %s133
    %s135 = sphi 0, %s133
    %s136 = sphi 0, %s135
    %s150 = sphi 0, %s136
    %s154 = sphi 0, %s154
    %s156 = sphi 0, %s154
    %s157 = sphi 0, %s156
    %s171 = sphi 0, %s157
    %s175 = sphi 0, %s175
    %s177 = sphi 0, %s175
    %s178 = sphi 0, %s177
    %s192 = sphi 0, %s178
    %s196 = sphi 0, %s196
    %s198 = sphi 0, %s196
    %s199 = sphi 0, %s198
    %s213 = sphi 0, %s199
    %s219 = sphi 0, %s221
    %s222 = sphi 0, %s219
    %s223 = sphi 0, %s222
    %s239 = sphi 0, %s223
  $region4: #{_mmg_forward_jit.1} parent=0 // loop_header_branch
    %18 = sbr.rel (%p16) target = $region8
  $region5: #{_mmg_forward_jit.1} parent=0 // loop_body
    %s20 = ssub.s32 %s15, 1
    %s21 = ssub.s32 %s15, 2
    %s22 = sadd.s32 %s15, 1
    %s23 = ssub.s32 %s15, %s22
    %p24 = scmp.eq.s32.totalorder %s23, 0
    %s26 = sadd.s32 %s25, 1
    %s27 = scalar_select %p24, %s25, %s26
    %p30 = pneg %p24
    %p31 = scmp.eq.s32.totalorder %s15, 1
    %p32 = por %p30, %p31
    %p33 = scmp.ne.s32.totalorder %s25, %s28
    %p34 = scmp.eq.s32.totalorder %s15, 0
    %p35 = por %p33, %p34
    %p36 = scmp.ne.s32.totalorder %s25, %s28
    %p37 = scmp.eq.s32.totalorder %s20, 1
    %p38 = por %p36, %p37
    %p39 = scmp.ne.s32.totalorder %s28, %s29
    %p40 = scmp.eq.s32.totalorder %s20, 0
    %p41 = por %p39, %p40
    %p42 = scmp.ne.s32.totalorder %s28, %s29
    %p43 = scmp.eq.s32.totalorder %s21, 1
    %p44 = por %p42, %p43
    %p46 = scmp.ne.s32.totalorder %s29, %s45
    %p47 = scmp.eq.s32.totalorder %s21, 0
    %p48 = por %p46, %p47
    %s50 = sadd.s32 %s49, 1
    %p53 = scmp.eq.s32.totalorder %s15, 1
    %p54 = scmp.ne.s32.totalorder %s49, %s51
    %p55 = scmp.eq.s32.totalorder %s15, 0
    %p56 = por %p54, %p55
    %p57 = scmp.ne.s32.totalorder %s49, %s51
    %p58 = scmp.eq.s32.totalorder %s20, 1
    %p59 = por %p57, %p58
    %p60 = scmp.ne.s32.totalorder %s51, %s52
    %p61 = scmp.eq.s32.totalorder %s20, 0
    %p62 = por %p60, %p61
    %p63 = scmp.ne.s32.totalorder %s51, %s52
    %p64 = scmp.eq.s32.totalorder %s21, 1
    %p65 = por %p63, %p64
    %p67 = scmp.ne.s32.totalorder %s52, %s66
    %p68 = scmp.eq.s32.totalorder %s21, 0
    %p69 = por %p67, %p68
    %s71 = sadd.s32 %s70, 1
    %p74 = scmp.eq.s32.totalorder %s15, 1
    %p75 = scmp.ne.s32.totalorder %s70, %s72
    %p76 = scmp.eq.s32.totalorder %s15, 0
    %p77 = por %p75, %p76
    %p78 = scmp.ne.s32.totalorder %s70, %s72
    %p79 = scmp.eq.s32.totalorder %s20, 1
    %p80 = por %p78, %p79
    %p81 = scmp.ne.s32.totalorder %s72, %s73
    %p82 = scmp.eq.s32.totalorder %s20, 0
    %p83 = por %p81, %p82
    %p84 = scmp.ne.s32.totalorder %s72, %s73
    %p85 = scmp.eq.s32.totalorder %s21, 1
    %p86 = por %p84, %p85
    %p88 = scmp.ne.s32.totalorder %s73, %s87
    %p89 = scmp.eq.s32.totalorder %s21, 0
    %p90 = por %p88, %p89
    %s92 = sadd.s32 %s91, 1
    %p95 = scmp.eq.s32.totalorder %s15, 1
    %p96 = scmp.ne.s32.totalorder %s91, %s93
    %p97 = scmp.eq.s32.totalorder %s15, 0
    %p98 = por %p96, %p97
    %p99 = scmp.ne.s32.totalorder %s91, %s93
    %p100 = scmp.eq.s32.totalorder %s20, 1
    %p101 = por %p99, %p100
    %p102 = scmp.ne.s32.totalorder %s93, %s94
    %p103 = scmp.eq.s32.totalorder %s20, 0
    %p104 = por %p102, %p103
    %p105 = scmp.ne.s32.totalorder %s93, %s94
    %p106 = scmp.eq.s32.totalorder %s21, 1
    %p107 = por %p105, %p106
    %p109 = scmp.ne.s32.totalorder %s94, %s108
    %p110 = scmp.eq.s32.totalorder %s21, 0
    %p111 = por %p109, %p110
    %s113 = sadd.s32 %s112, 1
    %p116 = scmp.eq.s32.totalorder %s15, 1
    %p117 = scmp.ne.s32.totalorder %s112, %s114
    %p118 = scmp.eq.s32.totalorder %s15, 0
    %p119 = por %p117, %p118
    %p120 = scmp.ne.s32.totalorder %s112, %s114
    %p121 = scmp.eq.s32.totalorder %s20, 1
    %p122 = por %p120, %p121
    %p123 = scmp.ne.s32.totalorder %s114, %s115
    %p124 = scmp.eq.s32.totalorder %s20, 0
    %p125 = por %p123, %p124
    %p126 = scmp.ne.s32.totalorder %s114, %s115
    %p127 = scmp.eq.s32.totalorder %s21, 1
    %p128 = por %p126, %p127
    %p130 = scmp.ne.s32.totalorder %s115, %s129
    %p131 = scmp.eq.s32.totalorder %s21, 0
    %p132 = por %p130, %p131
    %s134 = sadd.s32 %s133, 1
    %p137 = scmp.eq.s32.totalorder %s15, 1
    %p138 = scmp.ne.s32.totalorder %s133, %s135
    %p139 = scmp.eq.s32.totalorder %s15, 0
    %p140 = por %p138, %p139
    %p141 = scmp.ne.s32.totalorder %s133, %s135
    %p142 = scmp.eq.s32.totalorder %s20, 1
    %p143 = por %p141, %p142
    %p144 = scmp.ne.s32.totalorder %s135, %s136
    %p145 = scmp.eq.s32.totalorder %s20, 0
    %p146 = por %p144, %p145
    %p147 = scmp.ne.s32.totalorder %s135, %s136
    %p148 = scmp.eq.s32.totalorder %s21, 1
    %p149 = por %p147, %p148
    %p151 = scmp.ne.s32.totalorder %s136, %s150
    %p152 = scmp.eq.s32.totalorder %s21, 0
    %p153 = por %p151, %p152
    %s155 = sadd.s32 %s154, 1
    %p158 = scmp.eq.s32.totalorder %s15, 1
    %p159 = scmp.ne.s32.totalorder %s154, %s156
    %p160 = scmp.eq.s32.totalorder %s15, 0
    %p161 = por %p159, %p160
    %p162 = scmp.ne.s32.totalorder %s154, %s156
    %p163 = scmp.eq.s32.totalorder %s20, 1
    %p164 = por %p162, %p163
    %p165 = scmp.ne.s32.totalorder %s156, %s157
    %p166 = scmp.eq.s32.totalorder %s20, 0
    %p167 = por %p165, %p166
    %p168 = scmp.ne.s32.totalorder %s156, %s157
    %p169 = scmp.eq.s32.totalorder %s21, 1
    %p170 = por %p168, %p169
    %p172 = scmp.ne.s32.totalorder %s157, %s171
    %p173 = scmp.eq.s32.totalorder %s21, 0
    %p174 = por %p172, %p173
    %s176 = sadd.s32 %s175, 1
    %p179 = scmp.eq.s32.totalorder %s15, 1
    %p180 = scmp.ne.s32.totalorder %s175, %s177
    %p181 = scmp.eq.s32.totalorder %s15, 0
    %p182 = por %p180, %p181
    %p183 = scmp.ne.s32.totalorder %s175, %s177
    %p184 = scmp.eq.s32.totalorder %s20, 1
    %p185 = por %p183, %p184
    %p186 = scmp.ne.s32.totalorder %s177, %s178
    %p187 = scmp.eq.s32.totalorder %s20, 0
    %p188 = por %p186, %p187
    %p189 = scmp.ne.s32.totalorder %s177, %s178
    %p190 = scmp.eq.s32.totalorder %s21, 1
    %p191 = por %p189, %p190
    %p193 = scmp.ne.s32.totalorder %s178, %s192
    %p194 = scmp.eq.s32.totalorder %s21, 0
    %p195 = por %p193, %p194
    %s197 = sadd.s32 %s196, 1
    %p200 = scmp.eq.s32.totalorder %s15, 1
    %p201 = scmp.ne.s32.totalorder %s196, %s198
    %p202 = scmp.eq.s32.totalorder %s15, 0
    %p203 = por %p201, %p202
    %p204 = scmp.ne.s32.totalorder %s196, %s198
    %p205 = scmp.eq.s32.totalorder %s20, 1
    %p206 = por %p204, %p205
    %p207 = scmp.ne.s32.totalorder %s198, %s199
    %p208 = scmp.eq.s32.totalorder %s20, 0
    %p209 = por %p207, %p208
    %p210 = scmp.ne.s32.totalorder %s198, %s199
    %p211 = scmp.eq.s32.totalorder %s21, 1
    %p212 = por %p210, %p211
    %p214 = scmp.ne.s32.totalorder %s199, %s213
    %p215 = scmp.eq.s32.totalorder %s21, 0
    %p216 = por %p214, %p215
    %s217 = ssub.s32 %s15, %s22
    %p218 = scmp.eq.s32.totalorder %s217, 0
    %s220 = sadd.s32 %s219, 1
    %s221 = scalar_select %p218, %s219, %s220
    %p224 = pneg %p218
    %p225 = scmp.eq.s32.totalorder %s15, 1
    %p226 = por %p224, %p225
    %p227 = scmp.ne.s32.totalorder %s219, %s222
    %p228 = scmp.eq.s32.totalorder %s15, 0
    %p229 = por %p227, %p228
    %p230 = scmp.ne.s32.totalorder %s219, %s222
    %p231 = scmp.eq.s32.totalorder %s20, 1
    %p232 = por %p230, %p231
    %p233 = scmp.ne.s32.totalorder %s222, %s223
    %p234 = scmp.eq.s32.totalorder %s20, 0
    %p235 = por %p233, %p234
    %p236 = scmp.ne.s32.totalorder %s222, %s223
    %p237 = scmp.eq.s32.totalorder %s21, 1
    %p238 = por %p236, %p237
    %p240 = scmp.ne.s32.totalorder %s223, %s239
    %p241 = scmp.eq.s32.totalorder %s21, 0
    %p242 = por %p240, %p241
    %p243 = scmp.le.s32.totalorder 1, %s15
    %p244 = scmp.lt.s32.totalorder %s15, 3
    %p245 = pnand %p243, %p244
    %p246 = pneg %p245
    // Predicated region
    $region9: #{_mmg_forward_jit.1} parent=5 // pred_check
      _
    $region10: #{_mmg_forward_jit.1} parent=5 // pred_check_branch
      %248 = sbr.rel (%p245) target = $region12
    $region11: #{_mmg_forward_jit.1} parent=5 // pred_region
      %s249 = ssub.s32 %s15, 1
      // Predicated region
      $region13: #{_mmg_forward_jit.1} parent=11 // pred_check
        %p250 = pneg %p62
      $region14: #{_mmg_forward_jit.1} parent=11 // pred_check_branch
        %252 = sbr.rel (%p250) target = $region16
      $region15: #{_mmg_forward_jit.1} parent=11 // pred_region
        _
      $region16: #{_mmg_forward_jit.1} parent=11 // pred_fallthru
        _
      // Predicated region
      $region17: #{_mmg_forward_jit.1} parent=11 // pred_check
        %p253 = pneg %p83
      $region18: #{_mmg_forward_jit.1} parent=11 // pred_check_branch
        %255 = sbr.rel (%p253) target = $region20
      $region19: #{_mmg_forward_jit.1} parent=11 // pred_region
        _
      $region20: #{_mmg_forward_jit.1} parent=11 // pred_fallthru
        _
      // Predicated region
      $region21: #{_mmg_forward_jit.1} parent=11 // pred_check
        %p256 = pneg %p104
      $region22: #{_mmg_forward_jit.1} parent=11 // pred_check_branch
        %258 = sbr.rel (%p256) target = $region24
      $region23: #{_mmg_forward_jit.1} parent=11 // pred_region
        _
      $region24: #{_mmg_forward_jit.1} parent=11 // pred_fallthru
        _
      // Predicated region
      $region25: #{_mmg_forward_jit.1} parent=11 // pred_check
        %p259 = pneg %p125
      $region26: #{_mmg_forward_jit.1} parent=11 // pred_check_branch
        %261 = sbr.rel (%p259) target = $region28
      $region27: #{_mmg_forward_jit.1} parent=11 // pred_region
        _
      $region28: #{_mmg_forward_jit.1} parent=11 // pred_fallthru
        _
      // Predicated region
      $region29: #{_mmg_forward_jit.1} parent=11 // pred_check
        %p262 = pneg %p146
      $region30: #{_mmg_forward_jit.1} parent=11 // pred_check_branch
        %264 = sbr.rel (%p262) target = $region32
      $region31: #{_mmg_forward_jit.1} parent=11 // pred_region
        _
      $region32: #{_mmg_forward_jit.1} parent=11 // pred_fallthru
        _
      // Predicated region
      $region33: #{_mmg_forward_jit.1} parent=11 // pred_check
        %p265 = pneg %p167
      $region34: #{_mmg_forward_jit.1} parent=11 // pred_check_branch
        %267 = sbr.rel (%p265) target = $region36
      $region35: #{_mmg_forward_jit.1} parent=11 // pred_region
        _
      $region36: #{_mmg_forward_jit.1} parent=11 // pred_fallthru
        _
      // Predicated region
      $region37: #{_mmg_forward_jit.1} parent=11 // pred_check
        %p268 = pneg %p188
      $region38: #{_mmg_forward_jit.1} parent=11 // pred_check_branch
        %270 = sbr.rel (%p268) target = $region40
      $region39: #{_mmg_forward_jit.1} parent=11 // pred_region
        _
      $region40: #{_mmg_forward_jit.1} parent=11 // pred_fallthru
        _
      // Predicated region
      $region41: #{_mmg_forward_jit.1} parent=11 // pred_check
        %p271 = pneg %p209
      $region42: #{_mmg_forward_jit.1} parent=11 // pred_check_branch
        %273 = sbr.rel (%p271) target = $region44
      $region43: #{_mmg_forward_jit.1} parent=11 // pred_region
        _
      $region44: #{_mmg_forward_jit.1} parent=11 // pred_fallthru
        _
    $region12: #{_mmg_forward_jit.1} parent=5 // pred_fallthru
      _
    %p274 = scmp.lt.s32.totalorder %s15, 2
    // Predicated region
    $region45: #{_mmg_forward_jit.1} parent=5 // pred_check
      %p275 = pneg %p274
    $region46: #{_mmg_forward_jit.1} parent=5 // pred_check_branch
      %277 = sbr.rel (%p275) target = $region48
    $region47: #{_mmg_forward_jit.1} parent=5 // pred_region
      // Predicated region
      $region49: #{_mmg_forward_jit.1} parent=47 // pred_check
        %p278 = pneg %p35
      $region50: #{_mmg_forward_jit.1} parent=47 // pred_check_branch
        %280 = sbr.rel (%p278) target = $region52
      $region51: #{_mmg_forward_jit.1} parent=47 // pred_region
        %p281 = scmp.lt.s32.totalorder %s15, 1
        %s282 = scalar_select %p281, %s15, 1
        %s283 = smul.addr %s282, 16
        %s284 = smul.addr %s283, 8
        %s285 = scalar_lea.vmem %s0, %s284
      $region52: #{_mmg_forward_jit.1} parent=47 // pred_fallthru
        _
    $region48: #{_mmg_forward_jit.1} parent=5 // pred_fallthru
      _
    %p286 = scmp.le.s32.totalorder 1, %s15
    %p287 = scmp.lt.s32.totalorder %s15, 3
    %p288 = pnand %p286, %p287
    %p289 = pneg %p288
    // Predicated region
    $region53: #{_mmg_forward_jit.1} parent=5 // pred_check
      _
    $region54: #{_mmg_forward_jit.1} parent=5 // pred_check_branch
      %291 = sbr.rel (%p288) target = $region56
    $region55: #{_mmg_forward_jit.1} parent=5 // pred_region
      %s292 = ssub.s32 %s15, 1
      %p293 = scmp.lt.s32.totalorder %s20, 1
      %s294 = scalar_select %p293, %s20, 1
      %s295 = smul.addr %s294, 16
      %s296 = smul.addr %s295, 8
      %s297 = scalar_lea.vmem %s0, %s296
      %p298 = pneg %p41
      %p299 = pneg %p38
      %p300 = pneg %p62
      %p301 = pneg %p59
      %p302 = pneg %p83
      %p303 = pneg %p80
      %p304 = pneg %p104
      %p305 = pneg %p101
      %p306 = pneg %p125
      %p307 = pneg %p122
      %p308 = pneg %p146
      %p309 = pneg %p143
      %p310 = pneg %p167
      %p311 = pneg %p164
      %p312 = pneg %p188
      %p313 = pneg %p185
      %p314 = pneg %p209
      %p315 = pneg %p206
      %p316 = pneg %p235
      %p317 = pneg %p232
      %p318 = scmp.lt.s32.totalorder %s20, 1
      %s319 = scalar_select %p318, %s20, 1
      %s320 = smul.addr %s319, 4
      %s321 = smul.addr %s320, 8
      %s322 = scalar_lea.vmem %s9, %s321
      %p323 = scmp.lt.s32.totalorder %s20, 1
      %s324 = scalar_select %p323, %s20, 1
      %s325 = smul.addr %s324, 16
      %s326 = smul.addr %s325, 8
      %s327 = scalar_lea.vmem %s0, %s326
      %p328 = scmp.lt.s32.totalorder %s20, 1
      %s329 = scalar_select %p328, %s20, 1
      %s330 = smul.addr %s329, 4
      %s331 = smul.addr %s330, 8
      %s332 = scalar_lea.vmem %s9, %s331
      %v333 = vld [vmem:[%s327] sm:$0xff]
      %v334 = vld [vmem:[%s327 + $0x8] sm:$0xff]
      %v335 = vld [vmem:[%s327 + $0x10] sm:$0xff]
      %v336 = vld [vmem:[%s327 + $0x18] sm:$0xff]
      %v337 = vld [vmem:[%s327 + $0x20] sm:$0xff]
      %v338 = vld [vmem:[%s327 + $0x28] sm:$0xff]
      %v339 = vld [vmem:[%s327 + $0x30] sm:$0xff]
      %v340 = vld [vmem:[%s327 + $0x38] sm:$0xff]
      %v341 = vld [vmem:[%s327 + $0x40] sm:$0xff]
      %v342 = vld [vmem:[%s327 + $0x48] sm:$0xff]
      %v343 = vld [vmem:[%s327 + $0x50] sm:$0xff]
      %v344 = vld [vmem:[%s327 + $0x58] sm:$0xff]
      %v345 = vld [vmem:[%s327 + $0x60] sm:$0xff]
      %v346 = vld [vmem:[%s327 + $0x68] sm:$0xff]
      %v347 = vld [vmem:[%s327 + $0x70] sm:$0xff]
      %v348 = vld [vmem:[%s327 + $0x78] sm:$0xff]
      %v349 = vld [vmem:[%s1] sm:$0xff]
      %v350 = vld [vmem:[%s1 + $0x8] sm:$0xff]
      %v351 = vld [vmem:[%s1 + $0x10] sm:$0xff]
      %v352 = vld [vmem:[%s1 + $0x18] sm:$0xff]
      %v353 = vld [vmem:[%s1 + $0x20] sm:$0xff]
      %v354 = vld [vmem:[%s1 + $0x28] sm:$0xff]
      %vm355 = vcmask 523264
      %v357 = vsel %vm355, %v349, 0
      %v360 = vsel %vm355, %v350, 0
      %v363 = vsel %vm355, %v351, 0
      %v366 = vsel %vm355, %v352, 0
      %v369 = vsel %vm355, %v353, 0
      %v372 = vsel %vm355, %v354, 0
      %374 = vmatprep.subr.mxu0 %v334
      %375 = vmatpush1.msra.mxu0 %v333
      %376 = vmatprep.subr.mxu0 %v336
      %377 = vmatpush1.msra.mxu0 %v335
      %378 = vmatprep.subr.mxu0 %v338
      %379 = vmatpush1.msra.mxu0 %v337
      %380 = vmatprep.subr.mxu0 %v340
      %381 = vmatpush1.msra.mxu0 %v339
      %382 = vmatprep.subr.mxu0 %v342
      %383 = vmatpush1.msra.mxu0 %v341
      %384 = vmatprep.subr.mxu0 %v344
      %385 = vmatpush1.msra.mxu0 %v343
      %386 = vmatprep.subr.mxu0 %v346
      %387 = vmatpush1.msra.mxu0 %v345
      %388 = vmatprep.subr.mxu0 %v348
      %389 = vmatpush1.msra.mxu0 %v347
      %390 = vmatprep.subr.mxu0 0.0
      %391 = vmatpush1.msra.mxu0 0.0
      %392 = vmatprep.subr.mxu0 0.0
      %393 = vmatpush1.msra.mxu0 0.0
      %394 = vmatprep.subr.mxu0 0.0
      %395 = vmatpush1.msra.mxu0 0.0
      %396 = vmatprep.subr.mxu0 0.0
      %397 = vmatpush1.msra.mxu0 0.0
      %398 = vmatprep.subr.mxu0 0.0
      %399 = vmatpush1.msra.mxu0 0.0
      %400 = vmatprep.subr.mxu0 0.0
      %401 = vmatpush1.msra.mxu0 0.0
      %402 = vmatprep.subr.mxu0 0.0
      %403 = vmatpush1.msra.mxu0 0.0
      %404 = vmatprep.subr.mxu0 0.0
      %405 = vmatpush1.msra.mxu0 0.0
      %406 = vmatprep.subr.mxu0 0.0
      %407 = vmatpush1.msra.mxu0 0.0
      %408 = vmatprep.subr.mxu0 0.0
      %409 = vmatpush1.msra.mxu0 0.0
      %410 = vmatprep.subr.mxu0 0.0
      %411 = vmatpush1.msra.mxu0 0.0
      %412 = vmatprep.subr.mxu0 0.0
      %413 = vmatpush1.msra.mxu0 0.0
      %414 = vmatprep.subr.mxu0 0.0
      %415 = vmatpush1.msra.mxu0 0.0
      %416 = vmatprep.subr.mxu0 0.0
      %417 = vmatpush1.msra.mxu0 0.0
      %418 = vmatprep.subr.mxu0 0.0
      %419 = vmatpush1.msra.mxu0 0.0
      %420 = vmatprep.subr.mxu0 0.0
      %421 = vmatpush1.msra.mxu0 0.0
      %422 = vmatprep.subr.mxu0 0.0
      %423 = vmatpush1.msra.mxu0 0.0
      %424 = vmatprep.subr.mxu0 0.0
      %425 = vmatpush1.msra.mxu0 0.0
      %426 = vmatprep.subr.mxu0 0.0
      %427 = vmatpush1.msra.mxu0 0.0
      %428 = vmatprep.subr.mxu0 0.0
      %429 = vmatpush1.msra.mxu0 0.0
      %430 = vmatprep.subr.mxu0 0.0
      %431 = vmatpush1.msra.mxu0 0.0
      %432 = vmatprep.subr.mxu0 0.0
      %433 = vmatpush1.msra.mxu0 0.0
      %434 = vmatprep.subr.mxu0 0.0
      %435 = vmatpush1.msra.mxu0 0.0
      %436 = vmatprep.subr.mxu0 0.0
      %437 = vmatpush1.msra.mxu0 0.0
      %438 = vmatprep.mubr.f32.mxu0 0.0
      %439 = vmatmul.mubr.f32.gmra.mrb[0].mxu0 %v357
      %v440 = vpop.f32.mrb[0].mxu0
      %v441 = vadd.f32 0.0, %v440
      %v442 = vpop.f32.mrb[0].mxu0
      %v443 = vadd.f32 0.0, %v442
      %444 = vmatprep.mubr.f32.mxu0 0.0
      %445 = vmatmul.mubr.f32.gmra.mrb[0].mxu0 %v360
      %v446 = vpop.f32.mrb[0].mxu0
      %v447 = vadd.f32 0.0, %v446
      %v448 = vpop.f32.mrb[0].mxu0
      %v449 = vadd.f32 0.0, %v448
      %450 = vmatprep.mubr.f32.mxu0 0.0
      %451 = vmatmul.mubr.f32.gmra.mrb[0].mxu0 %v363
      %v452 = vpop.f32.mrb[0].mxu0
      %v453 = vadd.f32 0.0, %v452
      %v454 = vpop.f32.mrb[0].mxu0
      %v455 = vadd.f32 0.0, %v454
      %456 = vmatprep.mubr.f32.mxu0 0.0
      %457 = vmatmul.mubr.f32.gmra.mrb[0].mxu0 %v366
      %v458 = vpop.f32.mrb[0].mxu0
      %v459 = vadd.f32 0.0, %v458
      %v460 = vpop.f32.mrb[0].mxu0
      %v461 = vadd.f32 0.0, %v460
      %462 = vmatprep.mubr.f32.mxu0 0.0
      %463 = vmatmul.mubr.f32.gmra.mrb[0].mxu0 %v369
      %v464 = vpop.f32.mrb[0].mxu0
      %v465 = vadd.f32 0.0, %v464
      %v466 = vpop.f32.mrb[0].mxu0
      %v467 = vadd.f32 0.0, %v466
      %468 = vmatprep.mubr.f32.mxu0 0.0
      %469 = vmatmul.mubr.f32.gmra.mrb[0].mxu0 %v372
      %v470 = vpop.f32.mrb[0].mxu0
      %v471 = vadd.f32 0.0, %v470
      %v472 = vpop.f32.mrb[0].mxu0
      %v473 = vadd.f32 0.0, %v472
      %474 = vdwg.mxu0
      %v475 = vld [vmem:[%s4] sm:$0xff]
      %v476 = vld [vmem:[%s4 + $0x8] sm:$0xff]
      %v477 = vld [vmem:[%s4 + $0x10] sm:$0xff]
      %v478 = vld [vmem:[%s4 + $0x18] sm:$0xff]
      %v479 = vld [vmem:[%s5] sm:$0xff]
      %v480 = vld [vmem:[%s5 + $0x8] sm:$0xff]
      %v481 = vld [vmem:[%s5 + $0x10] sm:$0xff]
      %v482 = vld [vmem:[%s5 + $0x18] sm:$0xff]
      %v483 = vmul.f32 %v475, %v453
      %v484 = vmul.f32 %v476, %v455
      %v485 = vmul.f32 %v477, %v459
      %v486 = vmul.f32 %v478, %v461
      %v487 = vmul.f32 %v479, %v465
      %v488 = vmul.f32 %v480, %v467
      %v489 = vmul.f32 %v481, %v471
      %v490 = vmul.f32 %v482, %v473
      %v491 = vsub.f32 %v483, %v487
      %v492 = vsub.f32 %v484, %v488
      %v493 = vsub.f32 %v485, %v489
      %v494 = vsub.f32 %v486, %v490
      %v495 = vmul.f32 %v475, %v465
      %v496 = vmul.f32 %v476, %v467
      %v497 = vmul.f32 %v477, %v471
      %v498 = vmul.f32 %v478, %v473
      %v499 = vmul.f32 %v479, %v453
      %v500 = vmul.f32 %v480, %v455
      %v501 = vmul.f32 %v481, %v459
      %v502 = vmul.f32 %v482, %v461
      %v503 = vadd.f32 %v495, %v499
      %v504 = vadd.f32 %v496, %v500
      %v505 = vadd.f32 %v497, %v501
      %v506 = vadd.f32 %v498, %v502
      %v507 = vld [vmem:[%s2] sm:$0xff]
      %v508 = vld [vmem:[%s2 + $0x8] sm:$0xff]
      %v509 = vld [vmem:[%s3] sm:$0xff]
      %v510 = vld [vmem:[%s3 + $0x8] sm:$0xff]
      %vm511 = vcmask 130048
      %v513 = vsel %vm511, %v509, 0
      %v516 = vsel %vm511, %v510, 0
      %518 = vmatprep.subr.mxu0 %v504
      %519 = vmatpush1.msra.mxu0 %v503
      %520 = vmatprep.subr.mxu0 %v506
      %521 = vmatpush1.msra.mxu0 %v505
      %522 = vmatprep.subr.mxu0 0.0
      %523 = vmatpush1.msra.mxu0 0.0
      %524 = vmatprep.subr.mxu0 0.0
      %525 = vmatpush1.msra.mxu0 0.0
      %526 = vmatprep.subr.mxu0 0.0
      %527 = vmatpush1.msra.mxu0 0.0
      %528 = vmatprep.subr.mxu0 0.0
      %529 = vmatpush1.msra.mxu0 0.0
      %530 = vmatprep.subr.mxu0 0.0
      %531 = vmatpush1.msra.mxu0 0.0
      %532 = vmatprep.subr.mxu0 0.0
      %533 = vmatpush1.msra.mxu0 0.0
      %534 = vmatprep.subr.mxu0 0.0
      %535 = vmatpush1.msra.mxu0 0.0
      %536 = vmatprep.subr.mxu0 0.0
      %537 = vmatpush1.msra.mxu0 0.0
      %538 = vmatprep.subr.mxu0 0.0
      %539 = vmatpush1.msra.mxu0 0.0
      %540 = vmatprep.subr.mxu0 0.0
      %541 = vmatpush1.msra.mxu0 0.0
      %542 = vmatprep.subr.mxu0 0.0
      %543 = vmatpush1.msra.mxu0 0.0
      %544 = vmatprep.subr.mxu0 0.0
      %545 = vmatpush1.msra.mxu0 0.0
      %546 = vmatprep.subr.mxu0 0.0
      %547 = vmatpush1.msra.mxu0 0.0
      %548 = vmatprep.subr.mxu0 0.0
      %549 = vmatpush1.msra.mxu0 0.0
      %550 = vmatprep.subr.mxu0 0.0
      %551 = vmatpush1.msra.mxu0 0.0
      %552 = vmatprep.subr.mxu0 0.0
      %553 = vmatpush1.msra.mxu0 0.0
      %554 = vmatprep.subr.mxu0 0.0
      %555 = vmatpush1.msra.mxu0 0.0
      %556 = vmatprep.subr.mxu0 0.0
      %557 = vmatpush1.msra.mxu0 0.0
      %558 = vmatprep.subr.mxu0 0.0
      %559 = vmatpush1.msra.mxu0 0.0
      %560 = vmatprep.subr.mxu0 0.0
      %561 = vmatpush1.msra.mxu0 0.0
      %562 = vmatprep.subr.mxu0 0.0
      %563 = vmatpush1.msra.mxu0 0.0
      %564 = vmatprep.subr.mxu0 0.0
      %565 = vmatpush1.msra.mxu0 0.0
      %566 = vmatprep.subr.mxu0 0.0
      %567 = vmatpush1.msra.mxu0 0.0
      %568 = vmatprep.subr.mxu0 0.0
      %569 = vmatpush1.msra.mxu0 0.0
      %570 = vmatprep.subr.mxu0 0.0
      %571 = vmatpush1.msra.mxu0 0.0
      %572 = vmatprep.subr.mxu0 0.0
      %573 = vmatpush1.msra.mxu0 0.0
      %574 = vmatprep.subr.mxu0 0.0
      %575 = vmatpush1.msra.mxu0 0.0
      %576 = vmatprep.subr.mxu0 0.0
      %577 = vmatpush1.msra.mxu0 0.0
      %578 = vmatprep.subr.mxu0 0.0
      %579 = vmatpush1.msra.mxu0 0.0
      %580 = vmatprep.subr.mxu0 0.0
      %581 = vmatpush1.msra.mxu0 0.0
      %582 = vmatprep.mubr.f32.mxu0 0.0
      %583 = vmatmul.mubr.f32.gmra.mrb[0].mxu0 %v513
      %v584 = vpop.f32.mrb[0].mxu0
      %v585 = vadd.f32 0.0, %v584
      %v586 = vpop.f32.mrb[0].mxu0
      %v587 = vadd.f32 0.0, %v586
      %588 = vmatprep.mubr.f32.mxu0 0.0
      %589 = vmatmul.mubr.f32.gmra.mrb[0].mxu0 %v516
      %v590 = vpop.f32.mrb[0].mxu0
      %v591 = vadd.f32 0.0, %v590
      %v592 = vpop.f32.mrb[0].mxu0
      %v593 = vadd.f32 0.0, %v592
      %594 = vdwg.mxu0
      %v596 = vsel %vm511, %v507, 0
      %v599 = vsel %vm511, %v508, 0
      %601 = vmatprep.subr.mxu0 %v492
      %602 = vmatpush1.msra.mxu0 %v491
      %603 = vmatprep.subr.mxu0 %v494
      %604 = vmatpush1.msra.mxu0 %v493
      %605 = vmatprep.subr.mxu0 0.0
      %606 = vmatpush1.msra.mxu0 0.0
      %607 = vmatprep.subr.mxu0 0.0
      %608 = vmatpush1.msra.mxu0 0.0
      %609 = vmatprep.subr.mxu0 0.0
      %610 = vmatpush1.msra.mxu0 0.0
      %611 = vmatprep.subr.mxu0 0.0
      %612 = vmatpush1.msra.mxu0 0.0
      %613 = vmatprep.subr.mxu0 0.0
      %614 = vmatpush1.msra.mxu0 0.0
      %615 = vmatprep.subr.mxu0 0.0
      %616 = vmatpush1.msra.mxu0 0.0
      %617 = vmatprep.subr.mxu0 0.0
      %618 = vmatpush1.msra.mxu0 0.0
      %619 = vmatprep.subr.mxu0 0.0
      %620 = vmatpush1.msra.mxu0 0.0
      %621 = vmatprep.subr.mxu0 0.0
      %622 = vmatpush1.msra.mxu0 0.0
      %623 = vmatprep.subr.mxu0 0.0
      %624 = vmatpush1.msra.mxu0 0.0
      %625 = vmatprep.subr.mxu0 0.0
      %626 = vmatpush1.msra.mxu0 0.0
      %627 = vmatprep.subr.mxu0 0.0
      %628 = vmatpush1.msra.mxu0 0.0
      %629 = vmatprep.subr.mxu0 0.0
      %630 = vmatpush1.msra.mxu0 0.0
      %631 = vmatprep.subr.mxu0 0.0
      %632 = vmatpush1.msra.mxu0 0.0
      %633 = vmatprep.subr.mxu0 0.0
      %634 = vmatpush1.msra.mxu0 0.0
      %635 = vmatprep.subr.mxu0 0.0
      %636 = vmatpush1.msra.mxu0 0.0
      %637 = vmatprep.subr.mxu0 0.0
      %638 = vmatpush1.msra.mxu0 0.0
      %639 = vmatprep.subr.mxu0 0.0
      %640 = vmatpush1.msra.mxu0 0.0
      %641 = vmatprep.subr.mxu0 0.0
      %642 = vmatpush1.msra.mxu0 0.0
      %643 = vmatprep.subr.mxu0 0.0
      %644 = vmatpush1.msra.mxu0 0.0
      %645 = vmatprep.subr.mxu0 0.0
      %646 = vmatpush1.msra.mxu0 0.0
      %647 = vmatprep.subr.mxu0 0.0
      %648 = vmatpush1.msra.mxu0 0.0
      %649 = vmatprep.subr.mxu0 0.0
      %650 = vmatpush1.msra.mxu0 0.0
      %651 = vmatprep.subr.mxu0 0.0
      %652 = vmatpush1.msra.mxu0 0.0
      %653 = vmatprep.subr.mxu0 0.0
      %654 = vmatpush1.msra.mxu0 0.0
      %655 = vmatprep.subr.mxu0 0.0
      %656 = vmatpush1.msra.mxu0 0.0
      %657 = vmatprep.subr.mxu0 0.0
      %658 = vmatpush1.msra.mxu0 0.0
      %659 = vmatprep.subr.mxu0 0.0
      %660 = vmatpush1.msra.mxu0 0.0
      %661 = vmatprep.subr.mxu0 0.0
      %662 = vmatpush1.msra.mxu0 0.0
      %663 = vmatprep.subr.mxu0 0.0
      %664 = vmatpush1.msra.mxu0 0.0
      %665 = vmatprep.mubr.f32.mxu0 0.0
      %666 = vmatmul.mubr.f32.gmra.mrb[0].mxu0 %v596
      %v667 = vpop.f32.mrb[0].mxu0
      %v668 = vadd.f32 %v585, %v667
      %v669 = vpop.f32.mrb[0].mxu0
      %v670 = vadd.f32 %v587, %v669
      %671 = vmatprep.mubr.f32.mxu0 0.0
      %672 = vmatmul.mubr.f32.gmra.mrb[0].mxu0 %v599
      %v673 = vpop.f32.mrb[0].mxu0
      %v674 = vadd.f32 %v591, %v673
      %v675 = vpop.f32.mrb[0].mxu0
      %v676 = vadd.f32 %v593, %v675
      %677 = vdwg.mxu0
      %v678 = vadd.f32 %v441, %v668
      %v679 = vadd.f32 %v443, %v670
      %v680 = vadd.f32 %v447, %v674
      %v681 = vadd.f32 %v449, %v676
      %v682 = vld [vmem:[%s6] sm:$0xff]
      %v683 = vld [vmem:[%s6 + $0x8] sm:$0xff]
      %v684 = vld [vmem:[%s6 + $0x10] sm:$0xff]
      %v685 = vld [vmem:[%s6 + $0x18] sm:$0xff]
      %v686 = vld [vmem:[%s6 + $0x20] sm:$0xff]
      %v687 = vld [vmem:[%s6 + $0x28] sm:$0xff]
      %v688 = vld [vmem:[%s6 + $0x30] sm:$0xff]
      %v689 = vld [vmem:[%s6 + $0x38] sm:$0xff]
      %v690 = vld [vmem:[%s6 + $0x40] sm:$0xff]
      %v691 = vld [vmem:[%s6 + $0x48] sm:$0xff]
      %v692 = vld [vmem:[%s6 + $0x50] sm:$0xff]
      %v693 = vld [vmem:[%s6 + $0x58] sm:$0xff]
      %v694 = vld [vmem:[%s6 + $0x60] sm:$0xff]
      %v695 = vld [vmem:[%s6 + $0x68] sm:$0xff]
      %v696 = vld [vmem:[%s6 + $0x70] sm:$0xff]
      %v697 = vld [vmem:[%s6 + $0x78] sm:$0xff]
      %v698 = vld [vmem:[%s6 + $0x80] sm:$0xff]
      %v699 = vld [vmem:[%s6 + $0x88] sm:$0xff]
      %v700 = vld [vmem:[%s6 + $0x90] sm:$0xff]
      %v701 = vld [vmem:[%s6 + $0x98] sm:$0xff]
      %v702 = vld [vmem:[%s6 + $0xa0] sm:$0xff]
      %v703 = vld [vmem:[%s6 + $0xa8] sm:$0xff]
      %v704 = vld [vmem:[%s6 + $0xb0] sm:$0xff]
      %v705 = vld [vmem:[%s6 + $0xb8] sm:$0xff]
      %v706 = vld [vmem:[%s6 + $0xc0] sm:$0xff]
      %v707 = vld [vmem:[%s6 + $0xc8] sm:$0xff]
      %v708 = vld [vmem:[%s6 + $0xd0] sm:$0xff]
      %v709 = vld [vmem:[%s6 + $0xd8] sm:$0xff]
      %v710 = vld [vmem:[%s6 + $0xe0] sm:$0xff]
      %v711 = vld [vmem:[%s6 + $0xe8] sm:$0xff]
      %v712 = vld [vmem:[%s6 + $0xf0] sm:$0xff]
      %v713 = vld [vmem:[%s6 + $0xf8] sm:$0xff]
      %v714 = vld [vmem:[%s6 + $0x100] sm:$0xff]
      %v715 = vld [vmem:[%s6 + $0x108] sm:$0xff]
      %v716 = vld [vmem:[%s6 + $0x110] sm:$0xff]
      %v717 = vld [vmem:[%s6 + $0x118] sm:$0xff]
      %v718 = vld [vmem:[%s6 + $0x120] sm:$0xff]
      %v719 = vld [vmem:[%s6 + $0x128] sm:$0xff]
      %v720 = vld [vmem:[%s6 + $0x130] sm:$0xff]
      %v721 = vld [vmem:[%s6 + $0x138] sm:$0xff]
      %v722 = vld [vmem:[%s6 + $0x140] sm:$0xff]
      %v723 = vld [vmem:[%s6 + $0x148] sm:$0xff]
      %v724 = vld [vmem:[%s6 + $0x150] sm:$0xff]
      %v725 = vld [vmem:[%s6 + $0x158] sm:$0xff]
      %v726 = vld [vmem:[%s6 + $0x160] sm:$0xff]
      %v727 = vld [vmem:[%s6 + $0x168] sm:$0xff]
      %v728 = vld [vmem:[%s6 + $0x170] sm:$0xff]
      %v729 = vld [vmem:[%s6 + $0x178] sm:$0xff]
      %v730 = vld [vmem:[%s6 + $0x180] sm:$0xff]
      %v731 = vld [vmem:[%s6 + $0x188] sm:$0xff]
      %v732 = vld [vmem:[%s6 + $0x190] sm:$0xff]
      %v733 = vld [vmem:[%s6 + $0x198] sm:$0xff]
      %v734 = vld [vmem:[%s6 + $0x1a0] sm:$0xff]
      %v735 = vld [vmem:[%s6 + $0x1a8] sm:$0xff]
      %v736 = vld [vmem:[%s6 + $0x1b0] sm:$0xff]
      %v737 = vld [vmem:[%s6 + $0x1b8] sm:$0xff]
      %v738 = vld [vmem:[%s6 + $0x1c0] sm:$0xff]
      %v739 = vld [vmem:[%s6 + $0x1c8] sm:$0xff]
      %v740 = vld [vmem:[%s6 + $0x1d0] sm:$0xff]
      %v741 = vld [vmem:[%s6 + $0x1d8] sm:$0xff]
      %v742 = vld [vmem:[%s6 + $0x1e0] sm:$0xff]
      %v743 = vld [vmem:[%s6 + $0x1e8] sm:$0xff]
      %v744 = vld [vmem:[%s6 + $0x1f0] sm:$0xff]
      %v745 = vld [vmem:[%s6 + $0x1f8] sm:$0xff]
      %746 = vmatprep.subr.mxu0 %v683
      %747 = vmatpush1.msra.mxu0 %v682
      %748 = vmatprep.subr.mxu0 %v685
      %749 = vmatpush1.msra.mxu0 %v684
      %750 = vmatprep.subr.mxu0 %v687
      %751 = vmatpush1.msra.mxu0 %v686
      %752 = vmatprep.subr.mxu0 %v689
      %753 = vmatpush1.msra.mxu0 %v688
      %754 = vmatprep.subr.mxu0 %v691
      %755 = vmatpush1.msra.mxu0 %v690
      %756 = vmatprep.subr.mxu0 %v693
      %757 = vmatpush1.msra.mxu0 %v692
      %758 = vmatprep.subr.mxu0 %v695
      %759 = vmatpush1.msra.mxu0 %v694
      %760 = vmatprep.subr.mxu0 %v697
      %761 = vmatpush1.msra.mxu0 %v696
      %762 = vmatprep.subr.mxu0 %v699
      %763 = vmatpush1.msra.mxu0 %v698
      %764 = vmatprep.subr.mxu0 %v701
      %765 = vmatpush1.msra.mxu0 %v700
      %766 = vmatprep.subr.mxu0 %v703
      %767 = vmatpush1.msra.mxu0 %v702
      %768 = vmatprep.subr.mxu0 %v705
      %769 = vmatpush1.msra.mxu0 %v704
      %770 = vmatprep.subr.mxu0 %v707
      %771 = vmatpush1.msra.mxu0 %v706
      %772 = vmatprep.subr.mxu0 %v709
      %773 = vmatpush1.msra.mxu0 %v708
      %774 = vmatprep.subr.mxu0 %v711
      %775 = vmatpush1.msra.mxu0 %v710
      %776 = vmatprep.subr.mxu0 %v713
      %777 = vmatpush1.msra.mxu0 %v712
      %778 = vmatprep.subr.mxu0 %v715
      %779 = vmatpush1.msra.mxu0 %v714
      %780 = vmatprep.subr.mxu0 %v717
      %781 = vmatpush1.msra.mxu0 %v716
      %782 = vmatprep.subr.mxu0 %v719
      %783 = vmatpush1.msra.mxu0 %v718
      %784 = vmatprep.subr.mxu0 %v721
      %785 = vmatpush1.msra.mxu0 %v720
      %786 = vmatprep.subr.mxu0 %v723
      %787 = vmatpush1.msra.mxu0 %v722
      %788 = vmatprep.subr.mxu0 %v725
      %789 = vmatpush1.msra.mxu0 %v724
      %790 = vmatprep.subr.mxu0 %v727
      %791 = vmatpush1.msra.mxu0 %v726
      %792 = vmatprep.subr.mxu0 %v729
      %793 = vmatpush1.msra.mxu0 %v728
      %794 = vmatprep.subr.mxu0 %v731
      %795 = vmatpush1.msra.mxu0 %v730
      %796 = vmatprep.subr.mxu0 %v733
      %797 = vmatpush1.msra.mxu0 %v732
      %798 = vmatprep.subr.mxu0 %v735
      %799 = vmatpush1.msra.mxu0 %v734
      %800 = vmatprep.subr.mxu0 %v737
      %801 = vmatpush1.msra.mxu0 %v736
      %802 = vmatprep.subr.mxu0 %v739
      %803 = vmatpush1.msra.mxu0 %v738
      %804 = vmatprep.subr.mxu0 %v741
      %805 = vmatpush1.msra.mxu0 %v740
      %806 = vmatprep.subr.mxu0 %v743
      %807 = vmatpush1.msra.mxu0 %v742
      %808 = vmatprep.subr.mxu0 %v745
      %809 = vmatpush1.msra.mxu0 %v744
      %810 = vmatprep.mubr.f32.mxu0 %v679
      %811 = vmatmul.mubr.f32.gmra.mrb[0].mxu0 %v678
      %v812 = vpop.f32.mrb[0].mxu0
      %v813 = vadd.f32 0.0, %v812
      %v814 = vpop.f32.mrb[0].mxu0
      %v815 = vadd.f32 0.0, %v814
      %816 = vmatprep.mubr.f32.mxu0 %v681
      %817 = vmatmul.mubr.f32.gmra.mrb[0].mxu0 %v680
      %v818 = vpop.f32.mrb[0].mxu0
      %v819 = vadd.f32 0.0, %v818
      %v820 = vpop.f32.mrb[0].mxu0
      %v821 = vadd.f32 0.0, %v820
      %822 = vdwg.mxu0
      %v823 = vsub.f32 %v678, %v813
      %v824 = vsub.f32 %v679, %v815
      %v825 = vsub.f32 %v680, %v819
      %v826 = vsub.f32 %v681, %v821
      %v827 = vmul.f32 %v823, %v823
      %v828 = vmul.f32 %v824, %v824
      %v829 = vmul.f32 %v825, %v825
      %v830 = vmul.f32 %v826, %v826
      %831 = vmatprep.subr.mxu0 %v683
      %832 = vmatpush1.msra.mxu0 %v682
      %833 = vmatprep.subr.mxu0 %v685
      %834 = vmatpush1.msra.mxu0 %v684
      %835 = vmatprep.subr.mxu0 %v687
      %836 = vmatpush1.msra.mxu0 %v686
      %837 = vmatprep.subr.mxu0 %v689
      %838 = vmatpush1.msra.mxu0 %v688
      %839 = vmatprep.subr.mxu0 %v691
      %840 = vmatpush1.msra.mxu0 %v690
      %841 = vmatprep.subr.mxu0 %v693
      %842 = vmatpush1.msra.mxu0 %v692
      %843 = vmatprep.subr.mxu0 %v695
      %844 = vmatpush1.msra.mxu0 %v694
      %845 = vmatprep.subr.mxu0 %v697
      %846 = vmatpush1.msra.mxu0 %v696
      %847 = vmatprep.subr.mxu0 %v699
      %848 = vmatpush1.msra.mxu0 %v698
      %849 = vmatprep.subr.mxu0 %v701
      %850 = vmatpush1.msra.mxu0 %v700
      %851 = vmatprep.subr.mxu0 %v703
      %852 = vmatpush1.msra.mxu0 %v702
      %853 = vmatprep.subr.mxu0 %v705
      %854 = vmatpush1.msra.mxu0 %v704
      %855 = vmatprep.subr.mxu0 %v707
      %856 = vmatpush1.msra.mxu0 %v706
      %857 = vmatprep.subr.mxu0 %v709
      %858 = vmatpush1.msra.mxu0 %v708
      %859 = vmatprep.subr.mxu0 %v711
      %860 = vmatpush1.msra.mxu0 %v710
      %861 = vmatprep.subr.mxu0 %v713
      %862 = vmatpush1.msra.mxu0 %v712
      %863 = vmatprep.subr.mxu0 %v715
      %864 = vmatpush1.msra.mxu0 %v714
      %865 = vmatprep.subr.mxu0 %v717
      %866 = vmatpush1.msra.mxu0 %v716
      %867 = vmatprep.subr.mxu0 %v719
      %868 = vmatpush1.msra.mxu0 %v718
      %869 = vmatprep.subr.mxu0 %v721
      %870 = vmatpush1.msra.mxu0 %v720
      %871 = vmatprep.subr.mxu0 %v723
      %872 = vmatpush1.msra.mxu0 %v722
      %873 = vmatprep.subr.mxu0 %v725
      %874 = vmatpush1.msra.mxu0 %v724
      %875 = vmatprep.subr.mxu0 %v727
      %876 = vmatpush1.msra.mxu0 %v726
      %877 = vmatprep.subr.mxu0 %v729
      %878 = vmatpush1.msra.mxu0 %v728
      %879 = vmatprep.subr.mxu0 %v731
      %880 = vmatpush1.msra.mxu0 %v730
      %881 = vmatprep.subr.mxu0 %v733
      %882 = vmatpush1.msra.mxu0 %v732
      %883 = vmatprep.subr.mxu0 %v735
      %884 = vmatpush1.msra.mxu0 %v734
      %885 = vmatprep.subr.mxu0 %v737
      %886 = vmatpush1.msra.mxu0 %v736
      %887 = vmatprep.subr.mxu0 %v739
      %888 = vmatpush1.msra.mxu0 %v738
      %889 = vmatprep.subr.mxu0 %v741
      %890 = vmatpush1.msra.mxu0 %v740
      %891 = vmatprep.subr.mxu0 %v743
      %892 = vmatpush1.msra.mxu0 %v742
      %893 = vmatprep.subr.mxu0 %v745
      %894 = vmatpush1.msra.mxu0 %v744
      %895 = vmatprep.mubr.f32.mxu0 %v828
      %896 = vmatmul.mubr.f32.gmra.mrb[0].mxu0 %v827
      %v897 = vpop.f32.mrb[0].mxu0
      %v898 = vadd.f32 1e-05, %v897
      %v899 = vpop.f32.mrb[0].mxu0
      %v900 = vadd.f32 1e-05, %v899
      %901 = vmatprep.mubr.f32.mxu0 %v830
      %902 = vmatmul.mubr.f32.gmra.mrb[0].mxu0 %v829
      %v903 = vpop.f32.mrb[0].mxu0
      %v904 = vadd.f32 1e-05, %v903
      %v905 = vpop.f32.mrb[0].mxu0
      %v906 = vadd.f32 1e-05, %v905
      %907 = vdwg.mxu0
      %v908 = vrsqrt.pop %v898
      %v909 = vrsqrt.pop %v900
      %v910 = vrsqrt.pop %v904
      %v911 = vrsqrt.pop %v906
      %v912 = vmul.f32 %v823, %v908
      %v913 = vmul.f32 %v824, %v909
      %v914 = vmul.f32 %v825, %v910
      %v915 = vmul.f32 %v826, %v911
      %v916 = vld [vmem:[%s7] sm:$0xff]
      %v917 = vld [vmem:[%s7 + $0x8] sm:$0xff]
      %v918 = vld [vmem:[%s7 + $0x10] sm:$0xff]
      %v919 = vld [vmem:[%s7 + $0x18] sm:$0xff]
      %v920 = vld [vmem:[%s7 + $0x20] sm:$0xff]
      %v921 = vld [vmem:[%s7 + $0x28] sm:$0xff]
      %v922 = vld [vmem:[%s7 + $0x30] sm:$0xff]
      %v923 = vld [vmem:[%s7 + $0x38] sm:$0xff]
      %v924 = vld [vmem:[%s7 + $0x40] sm:$0xff]
      %v925 = vld [vmem:[%s7 + $0x48] sm:$0xff]
      %v926 = vld [vmem:[%s7 + $0x50] sm:$0xff]
      %v927 = vld [vmem:[%s7 + $0x58] sm:$0xff]
      %v928 = vld [vmem:[%s7 + $0x60] sm:$0xff]
      %v929 = vld [vmem:[%s7 + $0x68] sm:$0xff]
      %v930 = vld [vmem:[%s7 + $0x70] sm:$0xff]
      %v931 = vld [vmem:[%s7 + $0x78] sm:$0xff]
      %v932 = vld [vmem:[%s7 + $0x80] sm:$0xff]
      %v933 = vld [vmem:[%s7 + $0x88] sm:$0xff]
      %v934 = vld [vmem:[%s7 + $0x90] sm:$0xff]
      %v935 = vld [vmem:[%s7 + $0x98] sm:$0xff]
      %v936 = vld [vmem:[%s7 + $0xa0] sm:$0xff]
      %v937 = vld [vmem:[%s7 + $0xa8] sm:$0xff]
      %v938 = vld [vmem:[%s7 + $0xb0] sm:$0xff]
      %v939 = vld [vmem:[%s7 + $0xb8] sm:$0xff]
      %v940 = vld [vmem:[%s7 + $0xc0] sm:$0xff]
      %v941 = vld [vmem:[%s7 + $0xc8] sm:$0xff]
      %v942 = vld [vmem:[%s7 + $0xd0] sm:$0xff]
      %v943 = vld [vmem:[%s7 + $0xd8] sm:$0xff]
      %v944 = vld [vmem:[%s7 + $0xe0] sm:$0xff]
      %v945 = vld [vmem:[%s7 + $0xe8] sm:$0xff]
      %v946 = vld [vmem:[%s7 + $0xf0] sm:$0xff]
      %v947 = vld [vmem:[%s7 + $0xf8] sm:$0xff]
      %v948 = vld [vmem:[%s7 + $0x100] sm:$0xff]
      %v949 = vld [vmem:[%s7 + $0x108] sm:$0xff]
      %v950 = vld [vmem:[%s7 + $0x110] sm:$0xff]
      %v951 = vld [vmem:[%s7 + $0x118] sm:$0xff]
      %v952 = vld [vmem:[%s7 + $0x120] sm:$0xff]
      %v953 = vld [vmem:[%s7 + $0x128] sm:$0xff]
      %v954 = vld [vmem:[%s7 + $0x130] sm:$0xff]
      %v955 = vld [vmem:[%s7 + $0x138] sm:$0xff]
      %v956 = vld [vmem:[%s7 + $0x140] sm:$0xff]
      %v957 = vld [vmem:[%s7 + $0x148] sm:$0xff]
      %v958 = vld [vmem:[%s7 + $0x150] sm:$0xff]
      %v959 = vld [vmem:[%s7 + $0x158] sm:$0xff]
      %v960 = vld [vmem:[%s7 + $0x160] sm:$0xff]
      %v961 = vld [vmem:[%s7 + $0x168] sm:$0xff]
      %v962 = vld [vmem:[%s7 + $0x170] sm:$0xff]
      %v963 = vld [vmem:[%s7 + $0x178] sm:$0xff]
      %v964 = vld [vmem:[%s7 + $0x180] sm:$0xff]
      %v965 = vld [vmem:[%s7 + $0x188] sm:$0xff]
      %v966 = vld [vmem:[%s7 + $0x190] sm:$0xff]
      %v967 = vld [vmem:[%s7 + $0x198] sm:$0xff]
      %v968 = vld [vmem:[%s7 + $0x1a0] sm:$0xff]
      %v969 = vld [vmem:[%s7 + $0x1a8] sm:$0xff]
      %v970 = vld [vmem:[%s7 + $0x1b0] sm:$0xff]
      %v971 = vld [vmem:[%s7 + $0x1b8] sm:$0xff]
      %v972 = vld [vmem:[%s7 + $0x1c0] sm:$0xff]
      %v973 = vld [vmem:[%s7 + $0x1c8] sm:$0xff]
      %v974 = vld [vmem:[%s7 + $0x1d0] sm:$0xff]
      %v975 = vld [vmem:[%s7 + $0x1d8] sm:$0xff]
      %v976 = vld [vmem:[%s7 + $0x1e0] sm:$0xff]
      %v977 = vld [vmem:[%s7 + $0x1e8] sm:$0xff]
      %v978 = vld [vmem:[%s7 + $0x1f0] sm:$0xff]
      %v979 = vld [vmem:[%s7 + $0x1f8] sm:$0xff]
      %v980 = vld [vmem:[%s8] sm:$0x3]
      %v982 = vlaneseq
      %v983 = vshrl.u32 %v982, 7
      %v984 = vsub.s32 0, %v983
      %v985 = vrot.slane %v980, %v984
      %v986 = vlaneseq
      %v987 = vshrl.u32 %v986, 7
      %v988 = vsub.s32 1, %v987
      %v989 = vrot.slane %v980, %v988
      %992 = vmatprep.subr.mxu0 %v917
      %993 = vmatpush1.msra.mxu0 %v916
      %994 = vmatprep.subr.mxu0 %v919
      %995 = vmatpush1.msra.mxu0 %v918
      %996 = vmatprep.subr.mxu0 %v921
      %997 = vmatpush1.msra.mxu0 %v920
      %998 = vmatprep.subr.mxu0 %v923
      %999 = vmatpush1.msra.mxu0 %v922
      %1000 = vmatprep.subr.mxu0 %v925
      %1001 = vmatpush1.msra.mxu0 %v924
      %1002 = vmatprep.subr.mxu0 %v927
      %1003 = vmatpush1.msra.mxu0 %v926
      %1004 = vmatprep.subr.mxu0 %v929
      %1005 = vmatpush1.msra.mxu0 %v928
      %1006 = vmatprep.subr.mxu0 %v931
      %1007 = vmatpush1.msra.mxu0 %v930
      %1008 = vmatprep.subr.mxu0 %v933
      %1009 = vmatpush1.msra.mxu0 %v932
      %1010 = vmatprep.subr.mxu0 %v935
      %1011 = vmatpush1.msra.mxu0 %v934
      %1012 = vmatprep.subr.mxu0 %v937
      %1013 = vmatpush1.msra.mxu0 %v936
      %1014 = vmatprep.subr.mxu0 %v939
      %1015 = vmatpush1.msra.mxu0 %v938
      %1016 = vmatprep.subr.mxu0 %v941
      %1017 = vmatpush1.msra.mxu0 %v940
      %1018 = vmatprep.subr.mxu0 %v943
      %1019 = vmatpush1.msra.mxu0 %v942
      %1020 = vmatprep.subr.mxu0 %v945
      %1021 = vmatpush1.msra.mxu0 %v944
      %1022 = vmatprep.subr.mxu0 %v947
      %1023 = vmatpush1.msra.mxu0 %v946
      %1024 = vmatprep.subr.mxu0 %v949
      %1025 = vmatpush1.msra.mxu0 %v948
      %1026 = vmatprep.subr.mxu0 %v951
      %1027 = vmatpush1.msra.mxu0 %v950
      %1028 = vmatprep.subr.mxu0 %v953
      %1029 = vmatpush1.msra.mxu0 %v952
      %1030 = vmatprep.subr.mxu0 %v955
      %1031 = vmatpush1.msra.mxu0 %v954
      %1032 = vmatprep.subr.mxu0 %v957
      %1033 = vmatpush1.msra.mxu0 %v956
      %1034 = vmatprep.subr.mxu0 %v959
      %1035 = vmatpush1.msra.mxu0 %v958
      %1036 = vmatprep.subr.mxu0 %v961
      %1037 = vmatpush1.msra.mxu0 %v960
      %1038 = vmatprep.subr.mxu0 %v963
      %1039 = vmatpush1.msra.mxu0 %v962
      %1040 = vmatprep.subr.mxu0 %v965
      %1041 = vmatpush1.msra.mxu0 %v964
      %1042 = vmatprep.subr.mxu0 %v967
      %1043 = vmatpush1.msra.mxu0 %v966
      %1044 = vmatprep.subr.mxu0 %v969
      %1045 = vmatpush1.msra.mxu0 %v968
      %1046 = vmatprep.subr.mxu0 %v971
      %1047 = vmatpush1.msra.mxu0 %v970
      %1048 = vmatprep.subr.mxu0 %v973
      %1049 = vmatpush1.msra.mxu0 %v972
      %1050 = vmatprep.subr.mxu0 %v975
      %1051 = vmatpush1.msra.mxu0 %v974
      %1052 = vmatprep.subr.mxu0 %v977
      %1053 = vmatpush1.msra.mxu0 %v976
      %1054 = vmatprep.subr.mxu0 %v979
      %1055 = vmatpush1.msra.mxu0 %v978
      %1056 = vmatprep.mubr.f32.mxu0 %v913
      %1057 = vmatmul.mubr.f32.gmra.mrb[0].mxu0 %v912
      %v1058 = vpop.f32.mrb[0].mxu0
      %v1059 = vadd.f32 %v985, %v1058
      %v1060 = vpop.f32.mrb[0].mxu0
      %v1061 = vadd.f32 %v989, %v1060
      %1062 = vmatprep.mubr.f32.mxu0 %v915
      %1063 = vmatmul.mubr.f32.gmra.mrb[0].mxu0 %v914
      %v1064 = vpop.f32.mrb[0].mxu0
      %v1065 = vadd.f32 %v985, %v1064
      %v1066 = vpop.f32.mrb[0].mxu0
      %v1067 = vadd.f32 %v989, %v1066
      %1068 = vdwg.mxu0
      %1069 = vst [vmem:[%s332] sm:$0xff] %v1059
      %1070 = vst [vmem:[%s332 + $0x8] sm:$0xff] %v1061
      %1071 = vst [vmem:[%s332 + $0x10] sm:$0xff] %v1065
      %1072 = vst [vmem:[%s332 + $0x18] sm:$0xff] %v1067
      %p1073 = scmp.lt.s32.totalorder %s20, 1
      %s1074 = scalar_select %p1073, %s20, 1
      %s1075 = smul.addr %s1074, 4
      %s1076 = smul.addr %s1075, 8
      %s1077 = scalar_lea.vmem %s9, %s1076
      // Predicated region
      $region57: #{_mmg_forward_jit.1} parent=55 // pred_check
        %p1078 = pneg %p232
      $region58: #{_mmg_forward_jit.1} parent=55 // pred_check_branch
        %1080 = sbr.rel (%p1078) target = $region60
      $region59: #{_mmg_forward_jit.1} parent=55 // pred_region
        _
      $region60: #{_mmg_forward_jit.1} parent=55 // pred_fallthru
        _
    $region56: #{_mmg_forward_jit.1} parent=5 // pred_fallthru
      _
    %p1081 = scmp.le.s32.totalorder 2, %s15
    // Predicated region
    $region61: #{_mmg_forward_jit.1} parent=5 // pred_check
      %p1082 = pneg %p1081
    $region62: #{_mmg_forward_jit.1} parent=5 // pred_check_branch
      %1084 = sbr.rel (%p1082) target = $region64
    $region63: #{_mmg_forward_jit.1} parent=5 // pred_region
      %s1085 = ssub.s32 %s15, 2
      // Predicated region
      $region65: #{_mmg_forward_jit.1} parent=63 // pred_check
        %p1086 = pneg %p238
      $region66: #{_mmg_forward_jit.1} parent=63 // pred_check_branch
        %1088 = sbr.rel (%p1086) target = $region68
      $region67: #{_mmg_forward_jit.1} parent=63 // pred_region
        %p1089 = scmp.lt.s32.totalorder %s21, 1
        %s1090 = scalar_select %p1089, %s21, 1
        %s1091 = smul.addr %s1090, 4
        %s1092 = smul.addr %s1091, 8
        %s1093 = scalar_lea.vmem %s9, %s1092
      $region68: #{_mmg_forward_jit.1} parent=63 // pred_fallthru
        _
    $region64: #{_mmg_forward_jit.1} parent=5 // pred_fallthru
      _
  $region6: #{_mmg_forward_jit.1} parent=0 // loop_footer
    %s19 = sadd.s32 1, %s15
  $region7: #{_mmg_forward_jit.1} parent=0 // loop_footer_branch
    %14 = sbr.rel target = $region3
  $region8: #{_mmg_forward_jit.1} parent=0 // loop_exit
    _

</llo_original>
